<compile_context>
chip_gen: v7x
topology: tpu7x:2x2x1
jax: 0.10.0
libtpu: 0.0.40
codegen_flags: <defaults>
</compile_context>

<pallas_src>
import numpy as np
import jax
import jax.numpy as jnp
from jax import lax
from jax.experimental import pallas as pl
from jax.experimental.pallas import tpu as pltpu

NUM_LABELS = 4


def _round_up(x, m):
    return ((x + m - 1) // m) * m


def _ensemble_head_kernel(calec_ref, rob_ref, txt_ref, img_ref,
                          wa_ref, wb_ref, bias_ref, out_ref):
    f32 = jnp.float32
    dc = wa_ref.shape[0]          # 1024  (CALeC feature dim)
    dr = wb_ref.shape[0]          # 768   (RoBERTa pooled dim)
    dt = img_ref.shape[1]         # 512   (CLIP feature dim)
    nl = out_ref.shape[1]         # num_labels (4)

    wa = wa_ref[...].astype(f32)            # (dc, 1)  VMEM-resident matvec weight
    wb = wb_ref[...].astype(f32)            # (dr, 1)
    bias = bias_ref[0]                      # scalar classifier bias (SMEM)

    img = img_ref[...].astype(f32)          # (tb, dt) one row per batch element
    # Image normalized once per batch row; rsqrt goes to the EUP.
    # NOTE: like the PyTorch reference, an exactly zero-norm row yields NaN.
    inv_img = lax.rsqrt(jnp.sum(img * img, axis=-1, keepdims=True))   # (tb, 1)

    for l in range(nl):                     # nl == 4, unrolled at trace time
        # Per-label features are lane-aligned static slices of the batch row.
        cal_l = calec_ref[:, l * dc:(l + 1) * dc].astype(f32)   # (tb, dc)
        rob_l = rob_ref[:, l * dr:(l + 1) * dr].astype(f32)     # (tb, dr)
        txt_l = txt_ref[:, l * dt:(l + 1) * dt].astype(f32)     # (tb, dt)

        # Linear(1024+768 -> 1) as two matvecs on the otherwise-idle MXU.
        cls = (jnp.dot(cal_l, wa, preferred_element_type=f32)
               + jnp.dot(rob_l, wb, preferred_element_type=f32)
               + bias)                                          # (tb, 1)

        # CLIP cosine similarity of this label's text row vs its image row.
        dot = jnp.sum(txt_l * img, axis=-1, keepdims=True)      # (tb, 1)
        inv_txt = lax.rsqrt(jnp.sum(txt_l * txt_l, axis=-1, keepdims=True))
        sim = dot * inv_txt * inv_img                           # (tb, 1)

        out_ref[:, l:l + 1] = (cls + sim).astype(out_ref.dtype)


def ensemble_head(calec_encoder_output, roberta_pooled, image_features,
                  text_features, classifier_w, classifier_b,
                  num_labels=NUM_LABELS, block_batch=256):
    """Param plumbing + one gridded pallas_call.  Returns reshaped_logits (B, num_labels)."""
    R, dc = calec_encoder_output.shape       # R = batch * num_labels
    dr = roberta_pooled.shape[1]
    dt = text_features.shape[1]
    assert R % num_labels == 0
    B = R // num_labels
    assert image_features.shape == (B, dt)
    # Concat order of the classifier weight is [CALeC | RoBERTa] (matches torch.concat).
    assert classifier_w.shape == (1, dc + dr)

    # FREE metadata-only reshapes: each batch element becomes one row whose
    # lanes hold the 4 labels' features back-to-back (no HBM copy, no padding).
    calec2d = calec_encoder_output.reshape(B, num_labels * dc)
    rob2d = roberta_pooled.reshape(B, num_labels * dr)
    txt2d = text_features.reshape(B, num_labels * dt)

    # Batch-row tile: >= 2 grid blocks whenever possible (v7x has 2 TensorCores),
    # sublane-aligned (multiple of 8).  No wrapper-side padding — Pallas masks
    # the ragged last block.
    if B <= 8:
        tb = B                                           # single full-array block
    else:
        tb = max(8, min(_round_up(block_batch, 8), _round_up(pl.cdiv(B, 2), 8)))
    nblk = pl.cdiv(B, tb)

    # Classifier weight split + pre-transposed to (D, 1) MXU matvec operands.
    wa_t = classifier_w[:, :dc].reshape(dc, 1).astype(jnp.float32)
    wb_t = classifier_w[:, dc:].reshape(dr, 1).astype(jnp.float32)
    bias = classifier_b.reshape((1,)).astype(jnp.float32)

    out = pl.pallas_call(
        _ensemble_head_kernel,
        out_shape=jax.ShapeDtypeStruct((B, num_labels), jnp.float32),
        grid_spec=pltpu.PrefetchScalarGridSpec(
            num_scalar_prefetch=0,
            grid=(nblk,),
            in_specs=[
                pl.BlockSpec((tb, num_labels * dc), lambda i: (i, 0)),  # CALeC rows
                pl.BlockSpec((tb, num_labels * dr), lambda i: (i, 0)),  # RoBERTa rows
                pl.BlockSpec((tb, num_labels * dt), lambda i: (i, 0)),  # text rows
                pl.BlockSpec((tb, dt), lambda i: (i, 0)),               # image rows
                pl.BlockSpec((dc, 1), lambda i: (0, 0)),                # W (CALeC part)
                pl.BlockSpec((dr, 1), lambda i: (0, 0)),                # W (RoBERTa part)
                pl.BlockSpec(memory_space=pltpu.MemorySpace.SMEM),      # bias scalar
            ],
            out_specs=pl.BlockSpec((tb, num_labels), lambda i: (i, 0)),
        ),
        compiler_params=pltpu.CompilerParams(
            dimension_semantics=("parallel",),      # shard row tiles across TCs (v7x)
            vmem_limit_bytes=48 * 1024 * 1024,      # stays under v7x 64 MiB physical
        ),
    )(calec2d, rob2d, txt2d, image_features, wa_t, wb_t, bias)

    return out                                         # (B, num_labels) f32


def ensemble_model_t4_forward(calec_encoder_output, align_loss, roberta_pooled,
                              image_features, text_features, params, label=None):
    """Mirrors ensemble_model_t4.forward with backbone outputs as inputs."""
    # TODO(synk): CALeC / RoBERTa / CLIP encoders are external black-box
    # sub-modules; their outputs are taken directly as inputs here.
    reshaped_logits = ensemble_head(
        calec_encoder_output, roberta_pooled, image_features, text_features,
        params["classifier_w"], params["classifier_b"])
    loss = None
    if label is not None:
        # TODO(synk): CrossEntropyLoss branch (only active when label is given).
        pass
    return loss, align_loss, reshaped_logits


def _reference(calec_out, rob, img, txt_flat, cw, cb, b, num_labels):
    """Pure numpy reference reproducing the PyTorch ensemble_model_t4 math."""
    to32 = lambda x: np.asarray(jnp.asarray(x, jnp.float32))
    calec, rob, img, txt = to32(calec_out), to32(rob), to32(img), to32(txt_flat)
    cw, cb = to32(cw), to32(cb)
    txt = txt.reshape(b, num_labels, -1)
    img_n = img / np.linalg.norm(img, axis=-1, keepdims=True)
    txt_n = txt / np.linalg.norm(txt, axis=-1, keepdims=True)
    sim = np.einsum("bkd,bd->bk", txt_n, img_n)                      # (B, 4)
    ens = np.concatenate([calec, rob], axis=-1)
    logit = ens @ cw.T + cb
    logit = logit + sim.reshape(-1, 1)
    return logit.reshape(b, num_labels)


if __name__ == "__main__":
    # ---- check 1: small batch, single block, bf16 features ------------------
    B, L = 2, NUM_LABELS
    key = jax.random.PRNGKey(0)
    ks = jax.random.split(key, 6)
    calec_out = jax.random.normal(ks[0], (B * L, 1024), jnp.bfloat16)   # CALeC enc out
    roberta_pooled = jax.random.normal(ks[1], (B * L, 768), jnp.bfloat16)
    image_features = jax.random.normal(ks[2], (B, 512), jnp.bfloat16)   # encode_image
    text_features = jax.random.normal(ks[3], (B * L, 512), jnp.bfloat16)  # encode_text
    align_loss = jnp.float32(0.0)
    params = {
        "classifier_w": jax.random.normal(ks[4], (1, 1024 + 768), jnp.float32) * 0.02,
        "classifier_b": jax.random.normal(ks[5], (1,), jnp.float32) * 0.02,
    }

    loss, aloss, logits = ensemble_model_t4_forward(
        calec_out, align_loss, roberta_pooled, image_features, text_features, params)
    logits = jax.block_until_ready(logits)
    ref = _reference(calec_out, roberta_pooled, image_features, text_features,
                     params["classifier_w"], params["classifier_b"], B, L)
    assert logits.shape == (B, L), logits.shape
    assert np.allclose(np.asarray(logits), ref, rtol=2e-2, atol=2e-2), (
        np.asarray(logits), ref)

    # ---- check 2: multi-block grid + ragged (unpadded) last block, f32 ------
    B2 = 34                                     # block_batch=16 -> 3 blocks (16,16,2)
    k2 = jax.random.split(jax.random.PRNGKey(1), 4)
    calec2 = jax.random.normal(k2[0], (B2 * L, 1024), jnp.float32)
    rob2 = jax.random.normal(k2[1], (B2 * L, 768), jnp.float32)
    img2 = jax.random.normal(k2[2], (B2, 512), jnp.float32)
    txt2 = jax.random.normal(k2[3], (B2 * L, 512), jnp.float32)
    logits2 = ensemble_head(calec2, rob2, img2, txt2,
                            params["classifier_w"], params["classifier_b"],
                            block_batch=16)
    logits2 = jax.block_until_ready(logits2)
    ref2 = _reference(calec2, rob2, img2, txt2,
                      params["classifier_w"], params["classifier_b"], B2, L)
    assert logits2.shape == (B2, L), logits2.shape
    assert np.allclose(np.asarray(logits2), ref2, rtol=2e-2, atol=2e-2), (
        np.asarray(logits2), ref2)

    print("KERNEL_OK")
</pallas_src>

<mosaic_0001>
module attributes {stable_mosaic.version = 11 : i64} {
  func.func @_ensemble_head_kernel(%arg0: i32, %arg1: memref<2x4096xbf16, #tpu.memory_space<vmem>>, %arg2: memref<2x3072xbf16, #tpu.memory_space<vmem>>, %arg3: memref<2x2048xbf16, #tpu.memory_space<vmem>>, %arg4: memref<2x512xbf16, #tpu.memory_space<vmem>>, %arg5: memref<1024x1xf32, #tpu.memory_space<vmem>>, %arg6: memref<768x1xf32, #tpu.memory_space<vmem>>, %arg7: memref<1xf32, #tpu.memory_space<smem>>, %arg8: memref<2x4xf32, #tpu.memory_space<vmem>>) attributes {dimension_semantics = [#tpu.dimension_semantics<parallel>], iteration_bounds = array<i64: 1>, scalar_prefetch = 0 : i64, scratch_operands = 0 : i64, tpu.core_type = #tpu.core_type<tc>, window_params = [{transform_indices = @transform_0, window_bounds = array<i64: 2, 4096>}, {transform_indices = @transform_1, window_bounds = array<i64: 2, 3072>}, {transform_indices = @transform_2, window_bounds = array<i64: 2, 2048>}, {transform_indices = @transform_3, window_bounds = array<i64: 2, 512>}, {pipeline_mode = #tpu.pipeline_mode<synchronous>, transform_indices = @transform_4, window_bounds = array<i64: 1024, 1>}, {pipeline_mode = #tpu.pipeline_mode<synchronous>, transform_indices = @transform_5, window_bounds = array<i64: 768, 1>}, {transform_indices = @transform_6, window_bounds = array<i64: 1>}, {transform_indices = @transform_7, window_bounds = array<i64: 2, 4>}]} {
    %c0 = arith.constant 0 : index
    %c0_0 = arith.constant 0 : index
    %0 = vector.load %arg5[%c0, %c0_0] : memref<1024x1xf32, #tpu.memory_space<vmem>>, vector<1024x1xf32>
    %c0_1 = arith.constant 0 : index
    %c0_2 = arith.constant 0 : index
    %1 = vector.load %arg6[%c0_1, %c0_2] : memref<768x1xf32, #tpu.memory_space<vmem>>, vector<768x1xf32>
    %c0_3 = arith.constant 0 : index
    %2 = memref.load %arg7[%c0_3] : memref<1xf32, #tpu.memory_space<smem>>
    %c0_4 = arith.constant 0 : index
    %c0_5 = arith.constant 0 : index
    %3 = vector.load %arg4[%c0_4, %c0_5] : memref<2x512xbf16, #tpu.memory_space<vmem>>, vector<2x512xbf16>
    %4 = arith.extf %3 : vector<2x512xbf16> to vector<2x512xf32>
    %5 = arith.mulf %4, %4 : vector<2x512xf32>
    %cst = arith.constant dense<0.000000e+00> : vector<2xf32>
    %6 = vector.multi_reduction <add>, %5, %cst [1] : vector<2x512xf32> to vector<2xf32>
    %7 = vector.shape_cast %6 : vector<2xf32> to vector<2x1xf32>
    %8 = math.rsqrt %7 : vector<2x1xf32>
    %c0_6 = arith.constant 0 : index
    %c0_7 = arith.constant 0 : index
    %9 = vector.load %arg1[%c0_6, %c0_7] : memref<2x4096xbf16, #tpu.memory_space<vmem>>, vector<2x1024xbf16>
    %10 = arith.extf %9 : vector<2x1024xbf16> to vector<2x1024xf32>
    %c0_8 = arith.constant 0 : index
    %c0_9 = arith.constant 0 : index
    %11 = vector.load %arg2[%c0_8, %c0_9] : memref<2x3072xbf16, #tpu.memory_space<vmem>>, vector<2x768xbf16>
    %12 = arith.extf %11 : vector<2x768xbf16> to vector<2x768xf32>
    %c0_10 = arith.constant 0 : index
    %c0_11 = arith.constant 0 : index
    %13 = vector.load %arg3[%c0_10, %c0_11] : memref<2x2048xbf16, #tpu.memory_space<vmem>>, vector<2x512xbf16>
    %14 = arith.extf %13 : vector<2x512xbf16> to vector<2x512xf32>
    %cst_12 = arith.constant dense<0.000000e+00> : vector<2x1xf32>
    %15 = tpu.matmul %10, %0, %cst_12 {dimension_numbers = #tpu.dot_dimension_numbers<[1], [0], [0], [1], [0, 0, 1, 1], [], []>} : vector<2x1024xf32>, vector<1024x1xf32>, vector<2x1xf32> -> vector<2x1xf32>
    %cst_13 = arith.constant dense<0.000000e+00> : vector<2x1xf32>
    %16 = tpu.matmul %12, %1, %cst_13 {dimension_numbers = #tpu.dot_dimension_numbers<[1], [0], [0], [1], [0, 0, 1, 1], [], []>} : vector<2x768xf32>, vector<768x1xf32>, vector<2x1xf32> -> vector<2x1xf32>
    %17 = arith.addf %15, %16 : vector<2x1xf32>
    %18 = vector.broadcast %2 : f32 to vector<2x1xf32>
    %19 = arith.addf %17, %18 : vector<2x1xf32>
    %20 = arith.mulf %14, %4 : vector<2x512xf32>
    %cst_14 = arith.constant dense<0.000000e+00> : vector<2xf32>
    %21 = vector.multi_reduction <add>, %20, %cst_14 [1] : vector<2x512xf32> to vector<2xf32>
    %22 = vector.shape_cast %21 : vector<2xf32> to vector<2x1xf32>
    %23 = arith.mulf %14, %14 : vector<2x512xf32>
    %cst_15 = arith.constant dense<0.000000e+00> : vector<2xf32>
    %24 = vector.multi_reduction <add>, %23, %cst_15 [1] : vector<2x512xf32> to vector<2xf32>
    %25 = vector.shape_cast %24 : vector<2xf32> to vector<2x1xf32>
    %26 = math.rsqrt %25 : vector<2x1xf32>
    %27 = arith.mulf %22, %26 : vector<2x1xf32>
    %28 = arith.mulf %27, %8 : vector<2x1xf32>
    %29 = arith.addf %19, %28 : vector<2x1xf32>
    %c0_16 = arith.constant 0 : index
    %c0_17 = arith.constant 0 : index
    %30 = vector.load %arg8[%c0_16, %c0_17] : memref<2x4xf32, #tpu.memory_space<vmem>>, vector<2x1xf32>
    tpu.vector_store %arg8[%c0_16, %c0_17], %29 {strides = array<i32>} : memref<2x4xf32, #tpu.memory_space<vmem>>, vector<2x1xf32>,
    %c0_18 = arith.constant 0 : index
    %c1024 = arith.constant 1024 : index
    %31 = vector.load %arg1[%c0_18, %c1024] : memref<2x4096xbf16, #tpu.memory_space<vmem>>, vector<2x1024xbf16>
    %32 = arith.extf %31 : vector<2x1024xbf16> to vector<2x1024xf32>
    %c0_19 = arith.constant 0 : index
    %c768 = arith.constant 768 : index
    %33 = vector.load %arg2[%c0_19, %c768] : memref<2x3072xbf16, #tpu.memory_space<vmem>>, vector<2x768xbf16>
    %34 = arith.extf %33 : vector<2x768xbf16> to vector<2x768xf32>
    %c0_20 = arith.constant 0 : index
    %c512 = arith.constant 512 : index
    %35 = vector.load %arg3[%c0_20, %c512] : memref<2x2048xbf16, #tpu.memory_space<vmem>>, vector<2x512xbf16>
    %36 = arith.extf %35 : vector<2x512xbf16> to vector<2x512xf32>
    %cst_21 = arith.constant dense<0.000000e+00> : vector<2x1xf32>
    %37 = tpu.matmul %32, %0, %cst_21 {dimension_numbers = #tpu.dot_dimension_numbers<[1], [0], [0], [1], [0, 0, 1, 1], [], []>} : vector<2x1024xf32>, vector<1024x1xf32>, vector<2x1xf32> -> vector<2x1xf32>
    %cst_22 = arith.constant dense<0.000000e+00> : vector<2x1xf32>
    %38 = tpu.matmul %34, %1, %cst_22 {dimension_numbers = #tpu.dot_dimension_numbers<[1], [0], [0], [1], [0, 0, 1, 1], [], []>} : vector<2x768xf32>, vector<768x1xf32>, vector<2x1xf32> -> vector<2x1xf32>
    %39 = arith.addf %37, %38 : vector<2x1xf32>
    %40 = vector.broadcast %2 : f32 to vector<2x1xf32>
    %41 = arith.addf %39, %40 : vector<2x1xf32>
    %42 = arith.mulf %36, %4 : vector<2x512xf32>
    %cst_23 = arith.constant dense<0.000000e+00> : vector<2xf32>
    %43 = vector.multi_reduction <add>, %42, %cst_23 [1] : vector<2x512xf32> to vector<2xf32>
    %44 = vector.shape_cast %43 : vector<2xf32> to vector<2x1xf32>
    %45 = arith.mulf %36, %36 : vector<2x512xf32>
    %cst_24 = arith.constant dense<0.000000e+00> : vector<2xf32>
    %46 = vector.multi_reduction <add>, %45, %cst_24 [1] : vector<2x512xf32> to vector<2xf32>
    %47 = vector.shape_cast %46 : vector<2xf32> to vector<2x1xf32>
    %48 = math.rsqrt %47 : vector<2x1xf32>
    %49 = arith.mulf %44, %48 : vector<2x1xf32>
    %50 = arith.mulf %49, %8 : vector<2x1xf32>
    %51 = arith.addf %41, %50 : vector<2x1xf32>
    %c0_25 = arith.constant 0 : index
    %c1 = arith.constant 1 : index
    %52 = vector.load %arg8[%c0_25, %c1] : memref<2x4xf32, #tpu.memory_space<vmem>>, vector<2x1xf32>
    tpu.vector_store %arg8[%c0_25, %c1], %51 {strides = array<i32>} : memref<2x4xf32, #tpu.memory_space<vmem>>, vector<2x1xf32>,
    %c0_26 = arith.constant 0 : index
    %c2048 = arith.constant 2048 : index
    %53 = vector.load %arg1[%c0_26, %c2048] : memref<2x4096xbf16, #tpu.memory_space<vmem>>, vector<2x1024xbf16>
    %54 = arith.extf %53 : vector<2x1024xbf16> to vector<2x1024xf32>
    %c0_27 = arith.constant 0 : index
    %c1536 = arith.constant 1536 : index
    %55 = vector.load %arg2[%c0_27, %c1536] : memref<2x3072xbf16, #tpu.memory_space<vmem>>, vector<2x768xbf16>
    %56 = arith.extf %55 : vector<2x768xbf16> to vector<2x768xf32>
    %c0_28 = arith.constant 0 : index
    %c1024_29 = arith.constant 1024 : index
    %57 = vector.load %arg3[%c0_28, %c1024_29] : memref<2x2048xbf16, #tpu.memory_space<vmem>>, vector<2x512xbf16>
    %58 = arith.extf %57 : vector<2x512xbf16> to vector<2x512xf32>
    %cst_30 = arith.constant dense<0.000000e+00> : vector<2x1xf32>
    %59 = tpu.matmul %54, %0, %cst_30 {dimension_numbers = #tpu.dot_dimension_numbers<[1], [0], [0], [1], [0, 0, 1, 1], [], []>} : vector<2x1024xf32>, vector<1024x1xf32>, vector<2x1xf32> -> vector<2x1xf32>
    %cst_31 = arith.constant dense<0.000000e+00> : vector<2x1xf32>
    %60 = tpu.matmul %56, %1, %cst_31 {dimension_numbers = #tpu.dot_dimension_numbers<[1], [0], [0], [1], [0, 0, 1, 1], [], []>} : vector<2x768xf32>, vector<768x1xf32>, vector<2x1xf32> -> vector<2x1xf32>
    %61 = arith.addf %59, %60 : vector<2x1xf32>
    %62 = vector.broadcast %2 : f32 to vector<2x1xf32>
    %63 = arith.addf %61, %62 : vector<2x1xf32>
    %64 = arith.mulf %58, %4 : vector<2x512xf32>
    %cst_32 = arith.constant dense<0.000000e+00> : vector<2xf32>
    %65 = vector.multi_reduction <add>, %64, %cst_32 [1] : vector<2x512xf32> to vector<2xf32>
    %66 = vector.shape_cast %65 : vector<2xf32> to vector<2x1xf32>
    %67 = arith.mulf %58, %58 : vector<2x512xf32>
    %cst_33 = arith.constant dense<0.000000e+00> : vector<2xf32>
    %68 = vector.multi_reduction <add>, %67, %cst_33 [1] : vector<2x512xf32> to vector<2xf32>
    %69 = vector.shape_cast %68 : vector<2xf32> to vector<2x1xf32>
    %70 = math.rsqrt %69 : vector<2x1xf32>
    %71 = arith.mulf %66, %70 : vector<2x1xf32>
    %72 = arith.mulf %71, %8 : vector<2x1xf32>
    %73 = arith.addf %63, %72 : vector<2x1xf32>
    %c0_34 = arith.constant 0 : index
    %c2 = arith.constant 2 : index
    %74 = vector.load %arg8[%c0_34, %c2] : memref<2x4xf32, #tpu.memory_space<vmem>>, vector<2x1xf32>
    tpu.vector_store %arg8[%c0_34, %c2], %73 {strides = array<i32>} : memref<2x4xf32, #tpu.memory_space<vmem>>, vector<2x1xf32>,
    %c0_35 = arith.constant 0 : index
    %c3072 = arith.constant 3072 : index
    %75 = vector.load %arg1[%c0_35, %c3072] : memref<2x4096xbf16, #tpu.memory_space<vmem>>, vector<2x1024xbf16>
    %76 = arith.extf %75 : vector<2x1024xbf16> to vector<2x1024xf32>
    %c0_36 = arith.constant 0 : index
    %c2304 = arith.constant 2304 : index
    %77 = vector.load %arg2[%c0_36, %c2304] : memref<2x3072xbf16, #tpu.memory_space<vmem>>, vector<2x768xbf16>
    %78 = arith.extf %77 : vector<2x768xbf16> to vector<2x768xf32>
    %c0_37 = arith.constant 0 : index
    %c1536_38 = arith.constant 1536 : index
    %79 = vector.load %arg3[%c0_37, %c1536_38] : memref<2x2048xbf16, #tpu.memory_space<vmem>>, vector<2x512xbf16>
    %80 = arith.extf %79 : vector<2x512xbf16> to vector<2x512xf32>
    %cst_39 = arith.constant dense<0.000000e+00> : vector<2x1xf32>
    %81 = tpu.matmul %76, %0, %cst_39 {dimension_numbers = #tpu.dot_dimension_numbers<[1], [0], [0], [1], [0, 0, 1, 1], [], []>} : vector<2x1024xf32>, vector<1024x1xf32>, vector<2x1xf32> -> vector<2x1xf32>
    %cst_40 = arith.constant dense<0.000000e+00> : vector<2x1xf32>
    %82 = tpu.matmul %78, %1, %cst_40 {dimension_numbers = #tpu.dot_dimension_numbers<[1], [0], [0], [1], [0, 0, 1, 1], [], []>} : vector<2x768xf32>, vector<768x1xf32>, vector<2x1xf32> -> vector<2x1xf32>
    %83 = arith.addf %81, %82 : vector<2x1xf32>
    %84 = vector.broadcast %2 : f32 to vector<2x1xf32>
    %85 = arith.addf %83, %84 : vector<2x1xf32>
    %86 = arith.mulf %80, %4 : vector<2x512xf32>
    %cst_41 = arith.constant dense<0.000000e+00> : vector<2xf32>
    %87 = vector.multi_reduction <add>, %86, %cst_41 [1] : vector<2x512xf32> to vector<2xf32>
    %88 = vector.shape_cast %87 : vector<2xf32> to vector<2x1xf32>
    %89 = arith.mulf %80, %80 : vector<2x512xf32>
    %cst_42 = arith.constant dense<0.000000e+00> : vector<2xf32>
    %90 = vector.multi_reduction <add>, %89, %cst_42 [1] : vector<2x512xf32> to vector<2xf32>
    %91 = vector.shape_cast %90 : vector<2xf32> to vector<2x1xf32>
    %92 = math.rsqrt %91 : vector<2x1xf32>
    %93 = arith.mulf %88, %92 : vector<2x1xf32>
    %94 = arith.mulf %93, %8 : vector<2x1xf32>
    %95 = arith.addf %85, %94 : vector<2x1xf32>
    %c0_43 = arith.constant 0 : index
    %c3 = arith.constant 3 : index
    %96 = vector.load %arg8[%c0_43, %c3] : memref<2x4xf32, #tpu.memory_space<vmem>>, vector<2x1xf32>
    tpu.vector_store %arg8[%c0_43, %c3], %95 {strides = array<i32>} : memref<2x4xf32, #tpu.memory_space<vmem>>, vector<2x1xf32>,
    return
  }
  func.func @transform_0(%arg0: i32) -> (i32, i32) {
    %c0_i32 = arith.constant 0 : i32
    %c0_i32_0 = arith.constant 0 : i32
    return %arg0, %c0_i32 : i32, i32
  }
  func.func @transform_1(%arg0: i32) -> (i32, i32) {
    %c0_i32 = arith.constant 0 : i32
    %c0_i32_0 = arith.constant 0 : i32
    return %arg0, %c0_i32 : i32, i32
  }
  func.func @transform_2(%arg0: i32) -> (i32, i32) {
    %c0_i32 = arith.constant 0 : i32
    %c0_i32_0 = arith.constant 0 : i32
    return %arg0, %c0_i32 : i32, i32
  }
  func.func @transform_3(%arg0: i32) -> (i32, i32) {
    %c0_i32 = arith.constant 0 : i32
    %c0_i32_0 = arith.constant 0 : i32
    return %arg0, %c0_i32 : i32, i32
  }
  func.func @transform_4(%arg0: i32) -> (i32, i32) {
    %c0_i32 = arith.constant 0 : i32
    %c0_i32_0 = arith.constant 0 : i32
    %c0_i32_1 = arith.constant 0 : i32
    return %c0_i32, %c0_i32_0 : i32, i32
  }
  func.func @transform_5(%arg0: i32) -> (i32, i32) {
    %c0_i32 = arith.constant 0 : i32
    %c0_i32_0 = arith.constant 0 : i32
    %c0_i32_1 = arith.constant 0 : i32
    return %c0_i32, %c0_i32_0 : i32, i32
  }
  func.func @transform_6(%arg0: i32) -> i32 {
    %c0_i32 = arith.constant 0 : i32
    %c0_i32_0 = arith.constant 0 : i32
    return %c0_i32 : i32
  }
  func.func @transform_7(%arg0: i32) -> (i32, i32) {
    %c0_i32 = arith.constant 0 : i32
    %c0_i32_0 = arith.constant 0 : i32
    return %arg0, %c0_i32 : i32, i32
  }
}

</mosaic_0001>

<llo_original>
// kernel: tpu_custom_call.1
$region0: #{tpu_custom_call.1}
  #allocation0 [shape = 'u32[]', space=smem, size = 0x4, offset = 0x4, fixed_abs, tag = 'smem constant byte address 0x4 - core index']
  #allocation1 [shape = 'u32[144,128]{1,0:T(1,128)}', space=vmem, size = 0x12000, scoped, tag = 'internal scratch']
  #allocation2 [shape = 'f32[1]{0:T(128)S(6)}', space=smem, size = 0x200, scoped, tag = 'scoped memory for tpu_custom_call.1']
  %s0 = inlined_call_operand.vmem [shape: bf16[2,4096], index: 0, kind: input, shape index: {}]
  %s1 = inlined_call_operand.vmem [shape: bf16[2,3072], index: 1, kind: input, shape index: {}]
  %s2 = inlined_call_operand.vmem [shape: bf16[2,2048], index: 2, kind: input, shape index: {}]
  %s3 = inlined_call_operand.vmem [shape: bf16[2,512], index: 3, kind: input, shape index: {}]
  %s4 = inlined_call_operand.vmem [shape: f32[1024,1], index: 4, kind: input, shape index: {}]
  %s5 = inlined_call_operand.vmem [shape: f32[768,1], index: 5, kind: input, shape index: {}]
  %s6 = inlined_call_operand.<no memory space> [shape: f32[1], index: 6, kind: input, shape index: {}]
  %s7 = inlined_call_operand.hbm [shape: f32[2,4], index: 7, kind: output, shape index: {}]
  %s8 = sld [smem:[#allocation0]]
  $region38: #{tpu_custom_call.1} parent=0
    _
  %s10 = ssub.s32 1, %s8
  %s11 = scalar_select 0, %s10, %s8
  %12 = sst [smem:[#allocation2]] %s6
  $region1: #{tpu_custom_call.1} parent=0
    #allocation3 [shape = 'u8[1024]{0}', space=vmem, size = 0x400, scoped, tag = 'output window, operand 0, single buffered']
    #allocation4 [shape = 's32[1]{0}', space=sflag, size = 0x4, scoped, tag = 'scoped memory for tpu_custom_call.1']
    %13 = vsyncpa [#allocation4], 0
    // Predicated region
    $region2: #{tpu_custom_call.1} parent=1 // pred_check
      _
    $region3: #{tpu_custom_call.1} parent=1 // pred_check_branch
      %15 = sbr.rel (0) target = $region5
    $region4: #{tpu_custom_call.1} parent=1 // pred_region
      _
    $region5: #{tpu_custom_call.1} parent=1 // pred_fallthru
      _
    // Predicated region
    $region6: #{tpu_custom_call.1} parent=1 // pred_check
      _
    $region7: #{tpu_custom_call.1} parent=1 // pred_check_branch
      %17 = sbr.rel (0) target = $region9
    $region8: #{tpu_custom_call.1} parent=1 // pred_region
      _
    $region9: #{tpu_custom_call.1} parent=1 // pred_fallthru
      _
    // Predicated region
    $region10: #{tpu_custom_call.1} parent=1 // pred_check
      _
    $region11: #{tpu_custom_call.1} parent=1 // pred_check_branch
      %19 = sbr.rel (0) target = $region13
    $region12: #{tpu_custom_call.1} parent=1 // pred_region
      _
    $region13: #{tpu_custom_call.1} parent=1 // pred_fallthru
      _
    // Predicated region
    $region14: #{tpu_custom_call.1} parent=1 // pred_check
      _
    $region15: #{tpu_custom_call.1} parent=1 // pred_check_branch
      %21 = sbr.rel (0) target = $region17
    $region16: #{tpu_custom_call.1} parent=1 // pred_region
      _
    $region17: #{tpu_custom_call.1} parent=1 // pred_fallthru
      _
    // Predicated region
    $region18: #{tpu_custom_call.1} parent=1 // pred_check
      _
    $region19: #{tpu_custom_call.1} parent=1 // pred_check_branch
      %23 = sbr.rel (0) target = $region21
    $region20: #{tpu_custom_call.1} parent=1 // pred_region
      _
    $region21: #{tpu_custom_call.1} parent=1 // pred_fallthru
      _
    // Predicated region
    $region22: #{tpu_custom_call.1} parent=1 // pred_check
      _
    $region23: #{tpu_custom_call.1} parent=1 // pred_check_branch
      %25 = sbr.rel (0) target = $region25
    $region24: #{tpu_custom_call.1} parent=1 // pred_region
      _
    $region25: #{tpu_custom_call.1} parent=1 // pred_fallthru
      _
    // Predicated region
    $region26: #{tpu_custom_call.1} parent=1 // pred_check
      _
    $region27: #{tpu_custom_call.1} parent=1 // pred_check_branch
      %27 = sbr.rel (0) target = $region29
    $region28: #{tpu_custom_call.1} parent=1 // pred_region
      _
    $region29: #{tpu_custom_call.1} parent=1 // pred_fallthru
      _
    %v28 = vld [vmem:[%s4] sm:$0xff]
    %v29 = vld [vmem:[%s4 + $0x8] sm:$0xff]
    %v30 = vld [vmem:[%s4 + $0x10] sm:$0xff]
    %v31 = vld [vmem:[%s4 + $0x18] sm:$0xff]
    %v32 = vld [vmem:[%s4 + $0x20] sm:$0xff]
    %v33 = vld [vmem:[%s4 + $0x28] sm:$0xff]
    %v34 = vld [vmem:[%s4 + $0x30] sm:$0xff]
    %v35 = vld [vmem:[%s4 + $0x38] sm:$0xff]
    %v36 = vld [vmem:[%s4 + $0x40] sm:$0xff]
    %v37 = vld [vmem:[%s4 + $0x48] sm:$0xff]
    %v38 = vld [vmem:[%s4 + $0x50] sm:$0xff]
    %v39 = vld [vmem:[%s4 + $0x58] sm:$0xff]
    %v40 = vld [vmem:[%s4 + $0x60] sm:$0xff]
    %v41 = vld [vmem:[%s4 + $0x68] sm:$0xff]
    %v42 = vld [vmem:[%s4 + $0x70] sm:$0xff]
    %v43 = vld [vmem:[%s4 + $0x78] sm:$0xff]
    %v44 = vld [vmem:[%s4 + $0x80] sm:$0xff]
    %v45 = vld [vmem:[%s4 + $0x88] sm:$0xff]
    %v46 = vld [vmem:[%s4 + $0x90] sm:$0xff]
    %v47 = vld [vmem:[%s4 + $0x98] sm:$0xff]
    %v48 = vld [vmem:[%s4 + $0xa0] sm:$0xff]
    %v49 = vld [vmem:[%s4 + $0xa8] sm:$0xff]
    %v50 = vld [vmem:[%s4 + $0xb0] sm:$0xff]
    %v51 = vld [vmem:[%s4 + $0xb8] sm:$0xff]
    %v52 = vld [vmem:[%s4 + $0xc0] sm:$0xff]
    %v53 = vld [vmem:[%s4 + $0xc8] sm:$0xff]
    %v54 = vld [vmem:[%s4 + $0xd0] sm:$0xff]
    %v55 = vld [vmem:[%s4 + $0xd8] sm:$0xff]
    %v56 = vld [vmem:[%s4 + $0xe0] sm:$0xff]
    %v57 = vld [vmem:[%s4 + $0xe8] sm:$0xff]
    %v58 = vld [vmem:[%s4 + $0xf0] sm:$0xff]
    %v59 = vld [vmem:[%s4 + $0xf8] sm:$0xff]
    %v60 = vld [vmem:[%s4 + $0x100] sm:$0xff]
    %v61 = vld [vmem:[%s4 + $0x108] sm:$0xff]
    %v62 = vld [vmem:[%s4 + $0x110] sm:$0xff]
    %v63 = vld [vmem:[%s4 + $0x118] sm:$0xff]
    %v64 = vld [vmem:[%s4 + $0x120] sm:$0xff]
    %v65 = vld [vmem:[%s4 + $0x128] sm:$0xff]
    %v66 = vld [vmem:[%s4 + $0x130] sm:$0xff]
    %v67 = vld [vmem:[%s4 + $0x138] sm:$0xff]
    %v68 = vld [vmem:[%s4 + $0x140] sm:$0xff]
    %v69 = vld [vmem:[%s4 + $0x148] sm:$0xff]
    %v70 = vld [vmem:[%s4 + $0x150] sm:$0xff]
    %v71 = vld [vmem:[%s4 + $0x158] sm:$0xff]
    %v72 = vld [vmem:[%s4 + $0x160] sm:$0xff]
    %v73 = vld [vmem:[%s4 + $0x168] sm:$0xff]
    %v74 = vld [vmem:[%s4 + $0x170] sm:$0xff]
    %v75 = vld [vmem:[%s4 + $0x178] sm:$0xff]
    %v76 = vld [vmem:[%s4 + $0x180] sm:$0xff]
    %v77 = vld [vmem:[%s4 + $0x188] sm:$0xff]
    %v78 = vld [vmem:[%s4 + $0x190] sm:$0xff]
    %v79 = vld [vmem:[%s4 + $0x198] sm:$0xff]
    %v80 = vld [vmem:[%s4 + $0x1a0] sm:$0xff]
    %v81 = vld [vmem:[%s4 + $0x1a8] sm:$0xff]
    %v82 = vld [vmem:[%s4 + $0x1b0] sm:$0xff]
    %v83 = vld [vmem:[%s4 + $0x1b8] sm:$0xff]
    %v84 = vld [vmem:[%s4 + $0x1c0] sm:$0xff]
    %v85 = vld [vmem:[%s4 + $0x1c8] sm:$0xff]
    %v86 = vld [vmem:[%s4 + $0x1d0] sm:$0xff]
    %v87 = vld [vmem:[%s4 + $0x1d8] sm:$0xff]
    %v88 = vld [vmem:[%s4 + $0x1e0] sm:$0xff]
    %v89 = vld [vmem:[%s4 + $0x1e8] sm:$0xff]
    %v90 = vld [vmem:[%s4 + $0x1f0] sm:$0xff]
    %v91 = vld [vmem:[%s4 + $0x1f8] sm:$0xff]
    %v92 = vld [vmem:[%s4 + $0x200] sm:$0xff]
    %v93 = vld [vmem:[%s4 + $0x208] sm:$0xff]
    %v94 = vld [vmem:[%s4 + $0x210] sm:$0xff]
    %v95 = vld [vmem:[%s4 + $0x218] sm:$0xff]
    %v96 = vld [vmem:[%s4 + $0x220] sm:$0xff]
    %v97 = vld [vmem:[%s4 + $0x228] sm:$0xff]
    %v98 = vld [vmem:[%s4 + $0x230] sm:$0xff]
    %v99 = vld [vmem:[%s4 + $0x238] sm:$0xff]
    %v100 = vld [vmem:[%s4 + $0x240] sm:$0xff]
    %v101 = vld [vmem:[%s4 + $0x248] sm:$0xff]
    %v102 = vld [vmem:[%s4 + $0x250] sm:$0xff]
    %v103 = vld [vmem:[%s4 + $0x258] sm:$0xff]
    %v104 = vld [vmem:[%s4 + $0x260] sm:$0xff]
    %v105 = vld [vmem:[%s4 + $0x268] sm:$0xff]
    %v106 = vld [vmem:[%s4 + $0x270] sm:$0xff]
    %v107 = vld [vmem:[%s4 + $0x278] sm:$0xff]
    %v108 = vld [vmem:[%s4 + $0x280] sm:$0xff]
    %v109 = vld [vmem:[%s4 + $0x288] sm:$0xff]
    %v110 = vld [vmem:[%s4 + $0x290] sm:$0xff]
    %v111 = vld [vmem:[%s4 + $0x298] sm:$0xff]
    %v112 = vld [vmem:[%s4 + $0x2a0] sm:$0xff]
    %v113 = vld [vmem:[%s4 + $0x2a8] sm:$0xff]
    %v114 = vld [vmem:[%s4 + $0x2b0] sm:$0xff]
    %v115 = vld [vmem:[%s4 + $0x2b8] sm:$0xff]
    %v116 = vld [vmem:[%s4 + $0x2c0] sm:$0xff]
    %v117 = vld [vmem:[%s4 + $0x2c8] sm:$0xff]
    %v118 = vld [vmem:[%s4 + $0x2d0] sm:$0xff]
    %v119 = vld [vmem:[%s4 + $0x2d8] sm:$0xff]
    %v120 = vld [vmem:[%s4 + $0x2e0] sm:$0xff]
    %v121 = vld [vmem:[%s4 + $0x2e8] sm:$0xff]
    %v122 = vld [vmem:[%s4 + $0x2f0] sm:$0xff]
    %v123 = vld [vmem:[%s4 + $0x2f8] sm:$0xff]
    %v124 = vld [vmem:[%s4 + $0x300] sm:$0xff]
    %v125 = vld [vmem:[%s4 + $0x308] sm:$0xff]
    %v126 = vld [vmem:[%s4 + $0x310] sm:$0xff]
    %v127 = vld [vmem:[%s4 + $0x318] sm:$0xff]
    %v128 = vld [vmem:[%s4 + $0x320] sm:$0xff]
    %v129 = vld [vmem:[%s4 + $0x328] sm:$0xff]
    %v130 = vld [vmem:[%s4 + $0x330] sm:$0xff]
    %v131 = vld [vmem:[%s4 + $0x338] sm:$0xff]
    %v132 = vld [vmem:[%s4 + $0x340] sm:$0xff]
    %v133 = vld [vmem:[%s4 + $0x348] sm:$0xff]
    %v134 = vld [vmem:[%s4 + $0x350] sm:$0xff]
    %v135 = vld [vmem:[%s4 + $0x358] sm:$0xff]
    %v136 = vld [vmem:[%s4 + $0x360] sm:$0xff]
    %v137 = vld [vmem:[%s4 + $0x368] sm:$0xff]
    %v138 = vld [vmem:[%s4 + $0x370] sm:$0xff]
    %v139 = vld [vmem:[%s4 + $0x378] sm:$0xff]
    %v140 = vld [vmem:[%s4 + $0x380] sm:$0xff]
    %v141 = vld [vmem:[%s4 + $0x388] sm:$0xff]
    %v142 = vld [vmem:[%s4 + $0x390] sm:$0xff]
    %v143 = vld [vmem:[%s4 + $0x398] sm:$0xff]
    %v144 = vld [vmem:[%s4 + $0x3a0] sm:$0xff]
    %v145 = vld [vmem:[%s4 + $0x3a8] sm:$0xff]
    %v146 = vld [vmem:[%s4 + $0x3b0] sm:$0xff]
    %v147 = vld [vmem:[%s4 + $0x3b8] sm:$0xff]
    %v148 = vld [vmem:[%s4 + $0x3c0] sm:$0xff]
    %v149 = vld [vmem:[%s4 + $0x3c8] sm:$0xff]
    %v150 = vld [vmem:[%s4 + $0x3d0] sm:$0xff]
    %v151 = vld [vmem:[%s4 + $0x3d8] sm:$0xff]
    %v152 = vld [vmem:[%s4 + $0x3e0] sm:$0xff]
    %v153 = vld [vmem:[%s4 + $0x3e8] sm:$0xff]
    %v154 = vld [vmem:[%s4 + $0x3f0] sm:$0xff]
    %v155 = vld [vmem:[%s4 + $0x3f8] sm:$0xff]
    %v156 = vld [vmem:[%s5] sm:$0xff]
    %v157 = vld [vmem:[%s5 + $0x8] sm:$0xff]
    %v158 = vld [vmem:[%s5 + $0x10] sm:$0xff]
    %v159 = vld [vmem:[%s5 + $0x18] sm:$0xff]
    %v160 = vld [vmem:[%s5 + $0x20] sm:$0xff]
    %v161 = vld [vmem:[%s5 + $0x28] sm:$0xff]
    %v162 = vld [vmem:[%s5 + $0x30] sm:$0xff]
    %v163 = vld [vmem:[%s5 + $0x38] sm:$0xff]
    %v164 = vld [vmem:[%s5 + $0x40] sm:$0xff]
    %v165 = vld [vmem:[%s5 + $0x48] sm:$0xff]
    %v166 = vld [vmem:[%s5 + $0x50] sm:$0xff]
    %v167 = vld [vmem:[%s5 + $0x58] sm:$0xff]
    %v168 = vld [vmem:[%s5 + $0x60] sm:$0xff]
    %v169 = vld [vmem:[%s5 + $0x68] sm:$0xff]
    %v170 = vld [vmem:[%s5 + $0x70] sm:$0xff]
    %v171 = vld [vmem:[%s5 + $0x78] sm:$0xff]
    %v172 = vld [vmem:[%s5 + $0x80] sm:$0xff]
    %v173 = vld [vmem:[%s5 + $0x88] sm:$0xff]
    %v174 = vld [vmem:[%s5 + $0x90] sm:$0xff]
    %v175 = vld [vmem:[%s5 + $0x98] sm:$0xff]
    %v176 = vld [vmem:[%s5 + $0xa0] sm:$0xff]
    %v177 = vld [vmem:[%s5 + $0xa8] sm:$0xff]
    %v178 = vld [vmem:[%s5 + $0xb0] sm:$0xff]
    %v179 = vld [vmem:[%s5 + $0xb8] sm:$0xff]
    %v180 = vld [vmem:[%s5 + $0xc0] sm:$0xff]
    %v181 = vld [vmem:[%s5 + $0xc8] sm:$0xff]
    %v182 = vld [vmem:[%s5 + $0xd0] sm:$0xff]
    %v183 = vld [vmem:[%s5 + $0xd8] sm:$0xff]
    %v184 = vld [vmem:[%s5 + $0xe0] sm:$0xff]
    %v185 = vld [vmem:[%s5 + $0xe8] sm:$0xff]
    %v186 = vld [vmem:[%s5 + $0xf0] sm:$0xff]
    %v187 = vld [vmem:[%s5 + $0xf8] sm:$0xff]
    %v188 = vld [vmem:[%s5 + $0x100] sm:$0xff]
    %v189 = vld [vmem:[%s5 + $0x108] sm:$0xff]
    %v190 = vld [vmem:[%s5 + $0x110] sm:$0xff]
    %v191 = vld [vmem:[%s5 + $0x118] sm:$0xff]
    %v192 = vld [vmem:[%s5 + $0x120] sm:$0xff]
    %v193 = vld [vmem:[%s5 + $0x128] sm:$0xff]
    %v194 = vld [vmem:[%s5 + $0x130] sm:$0xff]
    %v195 = vld [vmem:[%s5 + $0x138] sm:$0xff]
    %v196 = vld [vmem:[%s5 + $0x140] sm:$0xff]
    %v197 = vld [vmem:[%s5 + $0x148] sm:$0xff]
    %v198 = vld [vmem:[%s5 + $0x150] sm:$0xff]
    %v199 = vld [vmem:[%s5 + $0x158] sm:$0xff]
    %v200 = vld [vmem:[%s5 + $0x160] sm:$0xff]
    %v201 = vld [vmem:[%s5 + $0x168] sm:$0xff]
    %v202 = vld [vmem:[%s5 + $0x170] sm:$0xff]
    %v203 = vld [vmem:[%s5 + $0x178] sm:$0xff]
    %v204 = vld [vmem:[%s5 + $0x180] sm:$0xff]
    %v205 = vld [vmem:[%s5 + $0x188] sm:$0xff]
    %v206 = vld [vmem:[%s5 + $0x190] sm:$0xff]
    %v207 = vld [vmem:[%s5 + $0x198] sm:$0xff]
    %v208 = vld [vmem:[%s5 + $0x1a0] sm:$0xff]
    %v209 = vld [vmem:[%s5 + $0x1a8] sm:$0xff]
    %v210 = vld [vmem:[%s5 + $0x1b0] sm:$0xff]
    %v211 = vld [vmem:[%s5 + $0x1b8] sm:$0xff]
    %v212 = vld [vmem:[%s5 + $0x1c0] sm:$0xff]
    %v213 = vld [vmem:[%s5 + $0x1c8] sm:$0xff]
    %v214 = vld [vmem:[%s5 + $0x1d0] sm:$0xff]
    %v215 = vld [vmem:[%s5 + $0x1d8] sm:$0xff]
    %v216 = vld [vmem:[%s5 + $0x1e0] sm:$0xff]
    %v217 = vld [vmem:[%s5 + $0x1e8] sm:$0xff]
    %v218 = vld [vmem:[%s5 + $0x1f0] sm:$0xff]
    %v219 = vld [vmem:[%s5 + $0x1f8] sm:$0xff]
    %v220 = vld [vmem:[%s5 + $0x200] sm:$0xff]
    %v221 = vld [vmem:[%s5 + $0x208] sm:$0xff]
    %v222 = vld [vmem:[%s5 + $0x210] sm:$0xff]
    %v223 = vld [vmem:[%s5 + $0x218] sm:$0xff]
    %v224 = vld [vmem:[%s5 + $0x220] sm:$0xff]
    %v225 = vld [vmem:[%s5 + $0x228] sm:$0xff]
    %v226 = vld [vmem:[%s5 + $0x230] sm:$0xff]
    %v227 = vld [vmem:[%s5 + $0x238] sm:$0xff]
    %v228 = vld [vmem:[%s5 + $0x240] sm:$0xff]
    %v229 = vld [vmem:[%s5 + $0x248] sm:$0xff]
    %v230 = vld [vmem:[%s5 + $0x250] sm:$0xff]
    %v231 = vld [vmem:[%s5 + $0x258] sm:$0xff]
    %v232 = vld [vmem:[%s5 + $0x260] sm:$0xff]
    %v233 = vld [vmem:[%s5 + $0x268] sm:$0xff]
    %v234 = vld [vmem:[%s5 + $0x270] sm:$0xff]
    %v235 = vld [vmem:[%s5 + $0x278] sm:$0xff]
    %v236 = vld [vmem:[%s5 + $0x280] sm:$0xff]
    %v237 = vld [vmem:[%s5 + $0x288] sm:$0xff]
    %v238 = vld [vmem:[%s5 + $0x290] sm:$0xff]
    %v239 = vld [vmem:[%s5 + $0x298] sm:$0xff]
    %v240 = vld [vmem:[%s5 + $0x2a0] sm:$0xff]
    %v241 = vld [vmem:[%s5 + $0x2a8] sm:$0xff]
    %v242 = vld [vmem:[%s5 + $0x2b0] sm:$0xff]
    %v243 = vld [vmem:[%s5 + $0x2b8] sm:$0xff]
    %v244 = vld [vmem:[%s5 + $0x2c0] sm:$0xff]
    %v245 = vld [vmem:[%s5 + $0x2c8] sm:$0xff]
    %v246 = vld [vmem:[%s5 + $0x2d0] sm:$0xff]
    %v247 = vld [vmem:[%s5 + $0x2d8] sm:$0xff]
    %v248 = vld [vmem:[%s5 + $0x2e0] sm:$0xff]
    %v249 = vld [vmem:[%s5 + $0x2e8] sm:$0xff]
    %v250 = vld [vmem:[%s5 + $0x2f0] sm:$0xff]
    %v251 = vld [vmem:[%s5 + $0x2f8] sm:$0xff]
    %s252 = sld [smem:[#allocation2]]
    %v253 = vld [vmem:[%s3] sm:$0xf]
    %v254 = vunpack.c.l.bf16 %v253
    %v255 = vmul.f32 %v254, %v254
    %v257 = vcombine.high %v255, %v255
    %v259 = vunpack.c.l.s4 1983009808
    %v260 = vunpack.c.0.s8 %v259
    %v261 = vlaneseq
    %v262 = vshrl.u32 %v261, 7
    %v263 = vsub.s32 %v260, %v262
    %v264 = vrot.slane %v255, %v263
    %v266 = vunpack.c.l.s4 1983009808
    %v267 = vunpack.c.0.s8 %v266
    %v268 = vlaneseq
    %v269 = vshrl.u32 %v268, 7
    %v270 = vsub.s32 %v267, %v269
    %v271 = vrot.slane %v257, %v270
    %v272 = vcombine.high %v264, %v264
    %v273 = vcombine.high %v271, %v271
    %vm278 = vcmask 1041408
    %v279 = vsel %vm278, %v264, 0.0
    %v280 = vsel %vm278, %v272, 0.0
    %v281 = vadd.f32 %v279, %v280
    %v282 = vsel %vm278, %v271, 0.0
    %v283 = vadd.f32 %v281, %v282
    %v284 = vsel %vm278, %v273, 0.0
    %v285 = vadd.f32 %v283, %v284
    %286 = vadd.xlane.f32.xlu0 %v285
    %v287 = vpop.xlane.xlu0 %286
    %v288 = vrsqrt.pop %v287
    %v289 = vld [vmem:[%s0] sm:$0xff]
    %v290 = vunpack.c.l.bf16 %v289
    %v291 = vunpack.c.h.bf16 %v289
    %v292 = vld [vmem:[%s1] sm:$0x3f]
    %v293 = vunpack.c.l.bf16 %v292
    %v294 = vunpack.c.h.bf16 %v292
    %v295 = vld [vmem:[%s2] sm:$0xf]
    %v296 = vunpack.c.l.bf16 %v295
    %v299 = vcombine.high %v293, %v293
    %v301 = vunpack.c.l.s4 1983009808
    %v302 = vunpack.c.0.s8 %v301
    %v303 = vlaneseq
    %v304 = vshrl.u32 %v303, 7
    %v305 = vsub.s32 %v302, %v304
    %v306 = vrot.slane %v293, %v305
    %v308 = vunpack.c.l.s4 1983009808
    %v309 = vunpack.c.0.s8 %v308
    %v310 = vlaneseq
    %v311 = vshrl.u32 %v310, 7
    %v312 = vsub.s32 %v309, %v311
    %v313 = vrot.slane %v299, %v312
    %v314 = vcombine.high %v306, %v306
    %v315 = vcombine.high %v313, %v313
    %v317 = vunpack.c.l.s4 1983009808
    %v318 = vunpack.c.0.s8 %v317
    %v319 = vlaneseq
    %v320 = vshrl.u32 %v319, 7
    %v321 = vsub.s32 %v318, %v320
    %v322 = vrot.slane %v294, %v321
    %v323 = vcombine.high %v322, %v322
    %330 = vmatprep.subr.mxu0 0.0
    %331 = vmatpush1.msra.mxu0 %v156
    %332 = vmatprep.subr.mxu0 0.0
    %333 = vmatpush1.msra.mxu0 %v157
    %334 = vmatprep.subr.mxu0 0.0
    %335 = vmatpush1.msra.mxu0 %v158
    %336 = vmatprep.subr.mxu0 0.0
    %337 = vmatpush1.msra.mxu0 %v159
    %338 = vmatprep.subr.mxu0 0.0
    %339 = vmatpush1.msra.mxu0 %v160
    %340 = vmatprep.subr.mxu0 0.0
    %341 = vmatpush1.msra.mxu0 %v161
    %342 = vmatprep.subr.mxu0 0.0
    %343 = vmatpush1.msra.mxu0 %v162
    %344 = vmatprep.subr.mxu0 0.0
    %345 = vmatpush1.msra.mxu0 %v163
    %346 = vmatprep.subr.mxu0 0.0
    %347 = vmatpush1.msra.mxu0 %v164
    %348 = vmatprep.subr.mxu0 0.0
    %349 = vmatpush1.msra.mxu0 %v165
    %350 = vmatprep.subr.mxu0 0.0
    %351 = vmatpush1.msra.mxu0 %v166
    %352 = vmatprep.subr.mxu0 0.0
    %353 = vmatpush1.msra.mxu0 %v167
    %354 = vmatprep.subr.mxu0 0.0
    %355 = vmatpush1.msra.mxu0 %v168
    %356 = vmatprep.subr.mxu0 0.0
    %357 = vmatpush1.msra.mxu0 %v169
    %358 = vmatprep.subr.mxu0 0.0
    %359 = vmatpush1.msra.mxu0 %v170
    %360 = vmatprep.subr.mxu0 0.0
    %361 = vmatpush1.msra.mxu0 %v171
    %362 = vmatprep.subr.mxu0 0.0
    %363 = vmatpush1.msra.mxu0 %v172
    %364 = vmatprep.subr.mxu0 0.0
    %365 = vmatpush1.msra.mxu0 %v173
    %366 = vmatprep.subr.mxu0 0.0
    %367 = vmatpush1.msra.mxu0 %v174
    %368 = vmatprep.subr.mxu0 0.0
    %369 = vmatpush1.msra.mxu0 %v175
    %370 = vmatprep.subr.mxu0 0.0
    %371 = vmatpush1.msra.mxu0 %v176
    %372 = vmatprep.subr.mxu0 0.0
    %373 = vmatpush1.msra.mxu0 %v177
    %374 = vmatprep.subr.mxu0 0.0
    %375 = vmatpush1.msra.mxu0 %v178
    %376 = vmatprep.subr.mxu0 0.0
    %377 = vmatpush1.msra.mxu0 %v179
    %378 = vmatprep.subr.mxu0 0.0
    %379 = vmatpush1.msra.mxu0 %v180
    %380 = vmatprep.subr.mxu0 0.0
    %381 = vmatpush1.msra.mxu0 %v181
    %382 = vmatprep.subr.mxu0 0.0
    %383 = vmatpush1.msra.mxu0 %v182
    %384 = vmatprep.subr.mxu0 0.0
    %385 = vmatpush1.msra.mxu0 %v183
    %386 = vmatprep.subr.mxu0 0.0
    %387 = vmatpush1.msra.mxu0 %v184
    %388 = vmatprep.subr.mxu0 0.0
    %389 = vmatpush1.msra.mxu0 %v185
    %390 = vmatprep.subr.mxu0 0.0
    %391 = vmatpush1.msra.mxu0 %v186
    %392 = vmatprep.subr.mxu0 0.0
    %393 = vmatpush1.msra.mxu0 %v187
    %394 = vmatprep.mubr.f32.mxu0 %v314
    %395 = vmatmul.mubr.f32.gmra.mrb[0].mxu0 %v306
    %v396 = vpop.f32.mrb[0].mxu0
    %v397 = vadd.f32 0.0, %v396
    %v398 = vpop.f32.mrb[0].mxu0
    %399 = vdwg.mxu0
    %400 = vmatprep.subr.mxu0 0.0
    %401 = vmatpush1.msra.mxu0 %v188
    %402 = vmatprep.subr.mxu0 0.0
    %403 = vmatpush1.msra.mxu0 %v189
    %404 = vmatprep.subr.mxu0 0.0
    %405 = vmatpush1.msra.mxu0 %v190
    %406 = vmatprep.subr.mxu0 0.0
    %407 = vmatpush1.msra.mxu0 %v191
    %408 = vmatprep.subr.mxu0 0.0
    %409 = vmatpush1.msra.mxu0 %v192
    %410 = vmatprep.subr.mxu0 0.0
    %411 = vmatpush1.msra.mxu0 %v193
    %412 = vmatprep.subr.mxu0 0.0
    %413 = vmatpush1.msra.mxu0 %v194
    %414 = vmatprep.subr.mxu0 0.0
    %415 = vmatpush1.msra.mxu0 %v195
    %416 = vmatprep.subr.mxu0 0.0
    %417 = vmatpush1.msra.mxu0 %v196
    %418 = vmatprep.subr.mxu0 0.0
    %419 = vmatpush1.msra.mxu0 %v197
    %420 = vmatprep.subr.mxu0 0.0
    %421 = vmatpush1.msra.mxu0 %v198
    %422 = vmatprep.subr.mxu0 0.0
    %423 = vmatpush1.msra.mxu0 %v199
    %424 = vmatprep.subr.mxu0 0.0
    %425 = vmatpush1.msra.mxu0 %v200
    %426 = vmatprep.subr.mxu0 0.0
    %427 = vmatpush1.msra.mxu0 %v201
    %428 = vmatprep.subr.mxu0 0.0
    %429 = vmatpush1.msra.mxu0 %v202
    %430 = vmatprep.subr.mxu0 0.0
    %431 = vmatpush1.msra.mxu0 %v203
    %432 = vmatprep.subr.mxu0 0.0
    %433 = vmatpush1.msra.mxu0 %v204
    %434 = vmatprep.subr.mxu0 0.0
    %435 = vmatpush1.msra.mxu0 %v205
    %436 = vmatprep.subr.mxu0 0.0
    %437 = vmatpush1.msra.mxu0 %v206
    %438 = vmatprep.subr.mxu0 0.0
    %439 = vmatpush1.msra.mxu0 %v207
    %440 = vmatprep.subr.mxu0 0.0
    %441 = vmatpush1.msra.mxu0 %v208
    %442 = vmatprep.subr.mxu0 0.0
    %443 = vmatpush1.msra.mxu0 %v209
    %444 = vmatprep.subr.mxu0 0.0
    %445 = vmatpush1.msra.mxu0 %v210
    %446 = vmatprep.subr.mxu0 0.0
    %447 = vmatpush1.msra.mxu0 %v211
    %448 = vmatprep.subr.mxu0 0.0
    %449 = vmatpush1.msra.mxu0 %v212
    %450 = vmatprep.subr.mxu0 0.0
    %451 = vmatpush1.msra.mxu0 %v213
    %452 = vmatprep.subr.mxu0 0.0
    %453 = vmatpush1.msra.mxu0 %v214
    %454 = vmatprep.subr.mxu0 0.0
    %455 = vmatpush1.msra.mxu0 %v215
    %456 = vmatprep.subr.mxu0 0.0
    %457 = vmatpush1.msra.mxu0 %v216
    %458 = vmatprep.subr.mxu0 0.0
    %459 = vmatpush1.msra.mxu0 %v217
    %460 = vmatprep.subr.mxu0 0.0
    %461 = vmatpush1.msra.mxu0 %v218
    %462 = vmatprep.subr.mxu0 0.0
    %463 = vmatpush1.msra.mxu0 %v219
    %464 = vmatprep.mubr.f32.mxu0 %v315
    %465 = vmatmul.mubr.f32.gmra.mrb[0].mxu0 %v313
    %v466 = vpop.f32.mrb[0].mxu0
    %v467 = vadd.f32 %v397, %v466
    %v468 = vpop.f32.mrb[0].mxu0
    %469 = vdwg.mxu0
    %470 = vmatprep.subr.mxu0 0.0
    %471 = vmatpush1.msra.mxu0 %v220
    %472 = vmatprep.subr.mxu0 0.0
    %473 = vmatpush1.msra.mxu0 %v221
    %474 = vmatprep.subr.mxu0 0.0
    %475 = vmatpush1.msra.mxu0 %v222
    %476 = vmatprep.subr.mxu0 0.0
    %477 = vmatpush1.msra.mxu0 %v223
    %478 = vmatprep.subr.mxu0 0.0
    %479 = vmatpush1.msra.mxu0 %v224
    %480 = vmatprep.subr.mxu0 0.0
    %481 = vmatpush1.msra.mxu0 %v225
    %482 = vmatprep.subr.mxu0 0.0
    %483 = vmatpush1.msra.mxu0 %v226
    %484 = vmatprep.subr.mxu0 0.0
    %485 = vmatpush1.msra.mxu0 %v227
    %486 = vmatprep.subr.mxu0 0.0
    %487 = vmatpush1.msra.mxu0 %v228
    %488 = vmatprep.subr.mxu0 0.0
    %489 = vmatpush1.msra.mxu0 %v229
    %490 = vmatprep.subr.mxu0 0.0
    %491 = vmatpush1.msra.mxu0 %v230
    %492 = vmatprep.subr.mxu0 0.0
    %493 = vmatpush1.msra.mxu0 %v231
    %494 = vmatprep.subr.mxu0 0.0
    %495 = vmatpush1.msra.mxu0 %v232
    %496 = vmatprep.subr.mxu0 0.0
    %497 = vmatpush1.msra.mxu0 %v233
    %498 = vmatprep.subr.mxu0 0.0
    %499 = vmatpush1.msra.mxu0 %v234
    %500 = vmatprep.subr.mxu0 0.0
    %501 = vmatpush1.msra.mxu0 %v235
    %502 = vmatprep.subr.mxu0 0.0
    %503 = vmatpush1.msra.mxu0 %v236
    %504 = vmatprep.subr.mxu0 0.0
    %505 = vmatpush1.msra.mxu0 %v237
    %506 = vmatprep.subr.mxu0 0.0
    %507 = vmatpush1.msra.mxu0 %v238
    %508 = vmatprep.subr.mxu0 0.0
    %509 = vmatpush1.msra.mxu0 %v239
    %510 = vmatprep.subr.mxu0 0.0
    %511 = vmatpush1.msra.mxu0 %v240
    %512 = vmatprep.subr.mxu0 0.0
    %513 = vmatpush1.msra.mxu0 %v241
    %514 = vmatprep.subr.mxu0 0.0
    %515 = vmatpush1.msra.mxu0 %v242
    %516 = vmatprep.subr.mxu0 0.0
    %517 = vmatpush1.msra.mxu0 %v243
    %518 = vmatprep.subr.mxu0 0.0
    %519 = vmatpush1.msra.mxu0 %v244
    %520 = vmatprep.subr.mxu0 0.0
    %521 = vmatpush1.msra.mxu0 %v245
    %522 = vmatprep.subr.mxu0 0.0
    %523 = vmatpush1.msra.mxu0 %v246
    %524 = vmatprep.subr.mxu0 0.0
    %525 = vmatpush1.msra.mxu0 %v247
    %526 = vmatprep.subr.mxu0 0.0
    %527 = vmatpush1.msra.mxu0 %v248
    %528 = vmatprep.subr.mxu0 0.0
    %529 = vmatpush1.msra.mxu0 %v249
    %530 = vmatprep.subr.mxu0 0.0
    %531 = vmatpush1.msra.mxu0 %v250
    %532 = vmatprep.subr.mxu0 0.0
    %533 = vmatpush1.msra.mxu0 %v251
    %534 = vmatprep.mubr.f32.mxu0 %v323
    %535 = vmatmul.mubr.f32.gmra.mrb[0].mxu0 %v322
    %v536 = vpop.f32.mrb[0].mxu0
    %v537 = vadd.f32 %v467, %v536
    %v538 = vpop.f32.mrb[0].mxu0
    %539 = vdwg.mxu0
    %v542 = vcombine.high %v290, %v290
    %v544 = vunpack.c.l.s4 1983009808
    %v545 = vunpack.c.0.s8 %v544
    %v546 = vlaneseq
    %v547 = vshrl.u32 %v546, 7
    %v548 = vsub.s32 %v545, %v547
    %v549 = vrot.slane %v290, %v548
    %v551 = vunpack.c.l.s4 1983009808
    %v552 = vunpack.c.0.s8 %v551
    %v553 = vlaneseq
    %v554 = vshrl.u32 %v553, 7
    %v555 = vsub.s32 %v552, %v554
    %v556 = vrot.slane %v542, %v555
    %v557 = vcombine.high %v549, %v549
    %v558 = vcombine.high %v556, %v556
    %v559 = vcombine.high %v291, %v291
    %v561 = vunpack.c.l.s4 1983009808
    %v562 = vunpack.c.0.s8 %v561
    %v563 = vlaneseq
    %v564 = vshrl.u32 %v563, 7
    %v565 = vsub.s32 %v562, %v564
    %v566 = vrot.slane %v291, %v565
    %v568 = vunpack.c.l.s4 1983009808
    %v569 = vunpack.c.0.s8 %v568
    %v570 = vlaneseq
    %v571 = vshrl.u32 %v570, 7
    %v572 = vsub.s32 %v569, %v571
    %v573 = vrot.slane %v559, %v572
    %v574 = vcombine.high %v566, %v566
    %v575 = vcombine.high %v573, %v573
    %584 = vmatprep.subr.mxu0 0.0
    %585 = vmatpush1.msra.mxu0 %v28
    %586 = vmatprep.subr.mxu0 0.0
    %587 = vmatpush1.msra.mxu0 %v29
    %588 = vmatprep.subr.mxu0 0.0
    %589 = vmatpush1.msra.mxu0 %v30
    %590 = vmatprep.subr.mxu0 0.0
    %591 = vmatpush1.msra.mxu0 %v31
    %592 = vmatprep.subr.mxu0 0.0
    %593 = vmatpush1.msra.mxu0 %v32
    %594 = vmatprep.subr.mxu0 0.0
    %595 = vmatpush1.msra.mxu0 %v33
    %596 = vmatprep.subr.mxu0 0.0
    %597 = vmatpush1.msra.mxu0 %v34
    %598 = vmatprep.subr.mxu0 0.0
    %599 = vmatpush1.msra.mxu0 %v35
    %600 = vmatprep.subr.mxu0 0.0
    %601 = vmatpush1.msra.mxu0 %v36
    %602 = vmatprep.subr.mxu0 0.0
    %603 = vmatpush1.msra.mxu0 %v37
    %604 = vmatprep.subr.mxu0 0.0
    %605 = vmatpush1.msra.mxu0 %v38
    %606 = vmatprep.subr.mxu0 0.0
    %607 = vmatpush1.msra.mxu0 %v39
    %608 = vmatprep.subr.mxu0 0.0
    %609 = vmatpush1.msra.mxu0 %v40
    %610 = vmatprep.subr.mxu0 0.0
    %611 = vmatpush1.msra.mxu0 %v41
    %612 = vmatprep.subr.mxu0 0.0
    %613 = vmatpush1.msra.mxu0 %v42
    %614 = vmatprep.subr.mxu0 0.0
    %615 = vmatpush1.msra.mxu0 %v43
    %616 = vmatprep.subr.mxu0 0.0
    %617 = vmatpush1.msra.mxu0 %v44
    %618 = vmatprep.subr.mxu0 0.0
    %619 = vmatpush1.msra.mxu0 %v45
    %620 = vmatprep.subr.mxu0 0.0
    %621 = vmatpush1.msra.mxu0 %v46
    %622 = vmatprep.subr.mxu0 0.0
    %623 = vmatpush1.msra.mxu0 %v47
    %624 = vmatprep.subr.mxu0 0.0
    %625 = vmatpush1.msra.mxu0 %v48
    %626 = vmatprep.subr.mxu0 0.0
    %627 = vmatpush1.msra.mxu0 %v49
    %628 = vmatprep.subr.mxu0 0.0
    %629 = vmatpush1.msra.mxu0 %v50
    %630 = vmatprep.subr.mxu0 0.0
    %631 = vmatpush1.msra.mxu0 %v51
    %632 = vmatprep.subr.mxu0 0.0
    %633 = vmatpush1.msra.mxu0 %v52
    %634 = vmatprep.subr.mxu0 0.0
    %635 = vmatpush1.msra.mxu0 %v53
    %636 = vmatprep.subr.mxu0 0.0
    %637 = vmatpush1.msra.mxu0 %v54
    %638 = vmatprep.subr.mxu0 0.0
    %639 = vmatpush1.msra.mxu0 %v55
    %640 = vmatprep.subr.mxu0 0.0
    %641 = vmatpush1.msra.mxu0 %v56
    %642 = vmatprep.subr.mxu0 0.0
    %643 = vmatpush1.msra.mxu0 %v57
    %644 = vmatprep.subr.mxu0 0.0
    %645 = vmatpush1.msra.mxu0 %v58
    %646 = vmatprep.subr.mxu0 0.0
    %647 = vmatpush1.msra.mxu0 %v59
    %648 = vmatprep.mubr.f32.mxu0 %v557
    %649 = vmatmul.mubr.f32.gmra.mrb[0].mxu0 %v549
    %v650 = vpop.f32.mrb[0].mxu0
    %v651 = vadd.f32 %v537, %v650
    %v652 = vpop.f32.mrb[0].mxu0
    %653 = vdwg.mxu0
    %654 = vmatprep.subr.mxu0 0.0
    %655 = vmatpush1.msra.mxu0 %v60
    %656 = vmatprep.subr.mxu0 0.0
    %657 = vmatpush1.msra.mxu0 %v61
    %658 = vmatprep.subr.mxu0 0.0
    %659 = vmatpush1.msra.mxu0 %v62
    %660 = vmatprep.subr.mxu0 0.0
    %661 = vmatpush1.msra.mxu0 %v63
    %662 = vmatprep.subr.mxu0 0.0
    %663 = vmatpush1.msra.mxu0 %v64
    %664 = vmatprep.subr.mxu0 0.0
    %665 = vmatpush1.msra.mxu0 %v65
    %666 = vmatprep.subr.mxu0 0.0
    %667 = vmatpush1.msra.mxu0 %v66
    %668 = vmatprep.subr.mxu0 0.0
    %669 = vmatpush1.msra.mxu0 %v67
    %670 = vmatprep.subr.mxu0 0.0
    %671 = vmatpush1.msra.mxu0 %v68
    %672 = vmatprep.subr.mxu0 0.0
    %673 = vmatpush1.msra.mxu0 %v69
    %674 = vmatprep.subr.mxu0 0.0
    %675 = vmatpush1.msra.mxu0 %v70
    %676 = vmatprep.subr.mxu0 0.0
    %677 = vmatpush1.msra.mxu0 %v71
    %678 = vmatprep.subr.mxu0 0.0
    %679 = vmatpush1.msra.mxu0 %v72
    %680 = vmatprep.subr.mxu0 0.0
    %681 = vmatpush1.msra.mxu0 %v73
    %682 = vmatprep.subr.mxu0 0.0
    %683 = vmatpush1.msra.mxu0 %v74
    %684 = vmatprep.subr.mxu0 0.0
    %685 = vmatpush1.msra.mxu0 %v75
    %686 = vmatprep.subr.mxu0 0.0
    %687 = vmatpush1.msra.mxu0 %v76
    %688 = vmatprep.subr.mxu0 0.0
    %689 = vmatpush1.msra.mxu0 %v77
    %690 = vmatprep.subr.mxu0 0.0
    %691 = vmatpush1.msra.mxu0 %v78
    %692 = vmatprep.subr.mxu0 0.0
    %693 = vmatpush1.msra.mxu0 %v79
    %694 = vmatprep.subr.mxu0 0.0
    %695 = vmatpush1.msra.mxu0 %v80
    %696 = vmatprep.subr.mxu0 0.0
    %697 = vmatpush1.msra.mxu0 %v81
    %698 = vmatprep.subr.mxu0 0.0
    %699 = vmatpush1.msra.mxu0 %v82
    %700 = vmatprep.subr.mxu0 0.0
    %701 = vmatpush1.msra.mxu0 %v83
    %702 = vmatprep.subr.mxu0 0.0
    %703 = vmatpush1.msra.mxu0 %v84
    %704 = vmatprep.subr.mxu0 0.0
    %705 = vmatpush1.msra.mxu0 %v85
    %706 = vmatprep.subr.mxu0 0.0
    %707 = vmatpush1.msra.mxu0 %v86
    %708 = vmatprep.subr.mxu0 0.0
    %709 = vmatpush1.msra.mxu0 %v87
    %710 = vmatprep.subr.mxu0 0.0
    %711 = vmatpush1.msra.mxu0 %v88
    %712 = vmatprep.subr.mxu0 0.0
    %713 = vmatpush1.msra.mxu0 %v89
    %714 = vmatprep.subr.mxu0 0.0
    %715 = vmatpush1.msra.mxu0 %v90
    %716 = vmatprep.subr.mxu0 0.0
    %717 = vmatpush1.msra.mxu0 %v91
    %718 = vmatprep.mubr.f32.mxu0 %v558
    %719 = vmatmul.mubr.f32.gmra.mrb[0].mxu0 %v556
    %v720 = vpop.f32.mrb[0].mxu0
    %v721 = vadd.f32 %v651, %v720
    %v722 = vpop.f32.mrb[0].mxu0
    %723 = vdwg.mxu0
    %724 = vmatprep.subr.mxu0 0.0
    %725 = vmatpush1.msra.mxu0 %v92
    %726 = vmatprep.subr.mxu0 0.0
    %727 = vmatpush1.msra.mxu0 %v93
    %728 = vmatprep.subr.mxu0 0.0
    %729 = vmatpush1.msra.mxu0 %v94
    %730 = vmatprep.subr.mxu0 0.0
    %731 = vmatpush1.msra.mxu0 %v95
    %732 = vmatprep.subr.mxu0 0.0
    %733 = vmatpush1.msra.mxu0 %v96
    %734 = vmatprep.subr.mxu0 0.0
    %735 = vmatpush1.msra.mxu0 %v97
    %736 = vmatprep.subr.mxu0 0.0
    %737 = vmatpush1.msra.mxu0 %v98
    %738 = vmatprep.subr.mxu0 0.0
    %739 = vmatpush1.msra.mxu0 %v99
    %740 = vmatprep.subr.mxu0 0.0
    %741 = vmatpush1.msra.mxu0 %v100
    %742 = vmatprep.subr.mxu0 0.0
    %743 = vmatpush1.msra.mxu0 %v101
    %744 = vmatprep.subr.mxu0 0.0
    %745 = vmatpush1.msra.mxu0 %v102
    %746 = vmatprep.subr.mxu0 0.0
    %747 = vmatpush1.msra.mxu0 %v103
    %748 = vmatprep.subr.mxu0 0.0
    %749 = vmatpush1.msra.mxu0 %v104
    %750 = vmatprep.subr.mxu0 0.0
    %751 = vmatpush1.msra.mxu0 %v105
    %752 = vmatprep.subr.mxu0 0.0
    %753 = vmatpush1.msra.mxu0 %v106
    %754 = vmatprep.subr.mxu0 0.0
    %755 = vmatpush1.msra.mxu0 %v107
    %756 = vmatprep.subr.mxu0 0.0
    %757 = vmatpush1.msra.mxu0 %v108
    %758 = vmatprep.subr.mxu0 0.0
    %759 = vmatpush1.msra.mxu0 %v109
    %760 = vmatprep.subr.mxu0 0.0
    %761 = vmatpush1.msra.mxu0 %v110
    %762 = vmatprep.subr.mxu0 0.0
    %763 = vmatpush1.msra.mxu0 %v111
    %764 = vmatprep.subr.mxu0 0.0
    %765 = vmatpush1.msra.mxu0 %v112
    %766 = vmatprep.subr.mxu0 0.0
    %767 = vmatpush1.msra.mxu0 %v113
    %768 = vmatprep.subr.mxu0 0.0
    %769 = vmatpush1.msra.mxu0 %v114
    %770 = vmatprep.subr.mxu0 0.0
    %771 = vmatpush1.msra.mxu0 %v115
    %772 = vmatprep.subr.mxu0 0.0
    %773 = vmatpush1.msra.mxu0 %v116
    %774 = vmatprep.subr.mxu0 0.0
    %775 = vmatpush1.msra.mxu0 %v117
    %776 = vmatprep.subr.mxu0 0.0
    %777 = vmatpush1.msra.mxu0 %v118
    %778 = vmatprep.subr.mxu0 0.0
    %779 = vmatpush1.msra.mxu0 %v119
    %780 = vmatprep.subr.mxu0 0.0
    %781 = vmatpush1.msra.mxu0 %v120
    %782 = vmatprep.subr.mxu0 0.0
    %783 = vmatpush1.msra.mxu0 %v121
    %784 = vmatprep.subr.mxu0 0.0
    %785 = vmatpush1.msra.mxu0 %v122
    %786 = vmatprep.subr.mxu0 0.0
    %787 = vmatpush1.msra.mxu0 %v123
    %788 = vmatprep.mubr.f32.mxu0 %v574
    %789 = vmatmul.mubr.f32.gmra.mrb[0].mxu0 %v566
    %v790 = vpop.f32.mrb[0].mxu0
    %v791 = vadd.f32 %v721, %v790
    %v792 = vpop.f32.mrb[0].mxu0
    %793 = vdwg.mxu0
    %794 = vmatprep.subr.mxu0 0.0
    %795 = vmatpush1.msra.mxu0 %v124
    %796 = vmatprep.subr.mxu0 0.0
    %797 = vmatpush1.msra.mxu0 %v125
    %798 = vmatprep.subr.mxu0 0.0
    %799 = vmatpush1.msra.mxu0 %v126
    %800 = vmatprep.subr.mxu0 0.0
    %801 = vmatpush1.msra.mxu0 %v127
    %802 = vmatprep.subr.mxu0 0.0
    %803 = vmatpush1.msra.mxu0 %v128
    %804 = vmatprep.subr.mxu0 0.0
    %805 = vmatpush1.msra.mxu0 %v129
    %806 = vmatprep.subr.mxu0 0.0
    %807 = vmatpush1.msra.mxu0 %v130
    %808 = vmatprep.subr.mxu0 0.0
    %809 = vmatpush1.msra.mxu0 %v131
    %810 = vmatprep.subr.mxu0 0.0
    %811 = vmatpush1.msra.mxu0 %v132
    %812 = vmatprep.subr.mxu0 0.0
    %813 = vmatpush1.msra.mxu0 %v133
    %814 = vmatprep.subr.mxu0 0.0
    %815 = vmatpush1.msra.mxu0 %v134
    %816 = vmatprep.subr.mxu0 0.0
    %817 = vmatpush1.msra.mxu0 %v135
    %818 = vmatprep.subr.mxu0 0.0
    %819 = vmatpush1.msra.mxu0 %v136
    %820 = vmatprep.subr.mxu0 0.0
    %821 = vmatpush1.msra.mxu0 %v137
    %822 = vmatprep.subr.mxu0 0.0
    %823 = vmatpush1.msra.mxu0 %v138
    %824 = vmatprep.subr.mxu0 0.0
    %825 = vmatpush1.msra.mxu0 %v139
    %826 = vmatprep.subr.mxu0 0.0
    %827 = vmatpush1.msra.mxu0 %v140
    %828 = vmatprep.subr.mxu0 0.0
    %829 = vmatpush1.msra.mxu0 %v141
    %830 = vmatprep.subr.mxu0 0.0
    %831 = vmatpush1.msra.mxu0 %v142
    %832 = vmatprep.subr.mxu0 0.0
    %833 = vmatpush1.msra.mxu0 %v143
    %834 = vmatprep.subr.mxu0 0.0
    %835 = vmatpush1.msra.mxu0 %v144
    %836 = vmatprep.subr.mxu0 0.0
    %837 = vmatpush1.msra.mxu0 %v145
    %838 = vmatprep.subr.mxu0 0.0
    %839 = vmatpush1.msra.mxu0 %v146
    %840 = vmatprep.subr.mxu0 0.0
    %841 = vmatpush1.msra.mxu0 %v147
    %842 = vmatprep.subr.mxu0 0.0
    %843 = vmatpush1.msra.mxu0 %v148
    %844 = vmatprep.subr.mxu0 0.0
    %845 = vmatpush1.msra.mxu0 %v149
    %846 = vmatprep.subr.mxu0 0.0
    %847 = vmatpush1.msra.mxu0 %v150
    %848 = vmatprep.subr.mxu0 0.0
    %849 = vmatpush1.msra.mxu0 %v151
    %850 = vmatprep.subr.mxu0 0.0
    %851 = vmatpush1.msra.mxu0 %v152
    %852 = vmatprep.subr.mxu0 0.0
    %853 = vmatpush1.msra.mxu0 %v153
    %854 = vmatprep.subr.mxu0 0.0
    %855 = vmatpush1.msra.mxu0 %v154
    %856 = vmatprep.subr.mxu0 0.0
    %857 = vmatpush1.msra.mxu0 %v155
    %858 = vmatprep.mubr.f32.mxu0 %v575
    %859 = vmatmul.mubr.f32.gmra.mrb[0].mxu0 %v573
    %v860 = vpop.f32.mrb[0].mxu0
    %v861 = vadd.f32 %v791, %v860
    %v862 = vpop.f32.mrb[0].mxu0
    %863 = vdwg.mxu0
    %v864 = vstv %s252
    %v865 = vadd.f32 %v861, %v864
    %v866 = vmul.f32 %v296, %v254
    %v868 = vcombine.high %v866, %v866
    %v870 = vunpack.c.l.s4 1983009808
    %v871 = vunpack.c.0.s8 %v870
    %v872 = vlaneseq
    %v873 = vshrl.u32 %v872, 7
    %v874 = vsub.s32 %v871, %v873
    %v875 = vrot.slane %v866, %v874
    %v877 = vunpack.c.l.s4 1983009808
    %v878 = vunpack.c.0.s8 %v877
    %v879 = vlaneseq
    %v880 = vshrl.u32 %v879, 7
    %v881 = vsub.s32 %v878, %v880
    %v882 = vrot.slane %v868, %v881
    %v883 = vcombine.high %v875, %v875
    %v884 = vcombine.high %v882, %v882
    %v889 = vsel %vm278, %v875, 0.0
    %v890 = vsel %vm278, %v883, 0.0
    %v891 = vadd.f32 %v889, %v890
    %v892 = vsel %vm278, %v882, 0.0
    %v893 = vadd.f32 %v891, %v892
    %v894 = vsel %vm278, %v884, 0.0
    %v895 = vadd.f32 %v893, %v894
    %896 = vadd.xlane.f32.xlu0 %v895
    %v897 = vpop.xlane.xlu0 %896
    %v898 = vmul.f32 %v296, %v296
    %v900 = vcombine.high %v898, %v898
    %v902 = vunpack.c.l.s4 1983009808
    %v903 = vunpack.c.0.s8 %v902
    %v904 = vlaneseq
    %v905 = vshrl.u32 %v904, 7
    %v906 = vsub.s32 %v903, %v905
    %v907 = vrot.slane %v898, %v906
    %v909 = vunpack.c.l.s4 1983009808
    %v910 = vunpack.c.0.s8 %v909
    %v911 = vlaneseq
    %v912 = vshrl.u32 %v911, 7
    %v913 = vsub.s32 %v910, %v912
    %v914 = vrot.slane %v900, %v913
    %v915 = vcombine.high %v907, %v907
    %v916 = vcombine.high %v914, %v914
    %v921 = vsel %vm278, %v907, 0.0
    %v922 = vsel %vm278, %v915, 0.0
    %v923 = vadd.f32 %v921, %v922
    %v924 = vsel %vm278, %v914, 0.0
    %v925 = vadd.f32 %v923, %v924
    %v926 = vsel %vm278, %v916, 0.0
    %v927 = vadd.f32 %v925, %v926
    %928 = vadd.xlane.f32.xlu0 %v927
    %v929 = vpop.xlane.xlu0 %928
    %v930 = vrsqrt.pop %v929
    %v931 = vmul.f32 %v897, %v930
    %v932 = vmul.f32 %v931, %v288
    %v933 = vadd.f32 %v865, %v932
    %vm934 = vcmask 1024
    %935 = vst.msk [vmem:[#allocation3] sm:$0x3] %vm934, %v933
    %v936 = vld [vmem:[%s0 + $0x8] sm:$0xff]
    %v937 = vunpack.c.l.bf16 %v936
    %v938 = vunpack.c.h.bf16 %v936
    %v939 = vld [vmem:[%s1 + $0x6] sm:$0x3f]
    %v940 = vunpack.c.l.bf16 %v939
    %v941 = vunpack.c.h.bf16 %v939
    %v942 = vld [vmem:[%s2 + $0x4] sm:$0xf]
    %v943 = vunpack.c.l.bf16 %v942
    %v946 = vcombine.high %v940, %v940
    %v948 = vunpack.c.l.s4 1983009808
    %v949 = vunpack.c.0.s8 %v948
    %v950 = vlaneseq
    %v951 = vshrl.u32 %v950, 7
    %v952 = vsub.s32 %v949, %v951
    %v953 = vrot.slane %v940, %v952
    %v955 = vunpack.c.l.s4 1983009808
    %v956 = vunpack.c.0.s8 %v955
    %v957 = vlaneseq
    %v958 = vshrl.u32 %v957, 7
    %v959 = vsub.s32 %v956, %v958
    %v960 = vrot.slane %v946, %v959
    %v961 = vcombine.high %v953, %v953
    %v962 = vcombine.high %v960, %v960
    %v964 = vunpack.c.l.s4 1983009808
    %v965 = vunpack.c.0.s8 %v964
    %v966 = vlaneseq
    %v967 = vshrl.u32 %v966, 7
    %v968 = vsub.s32 %v965, %v967
    %v969 = vrot.slane %v941, %v968
    %v970 = vcombine.high %v969, %v969
    %977 = vmatprep.subr.mxu0 0.0
    %978 = vmatpush1.msra.mxu0 %v156
    %979 = vmatprep.subr.mxu0 0.0
    %980 = vmatpush1.msra.mxu0 %v157
    %981 = vmatprep.subr.mxu0 0.0
    %982 = vmatpush1.msra.mxu0 %v158
    %983 = vmatprep.subr.mxu0 0.0
    %984 = vmatpush1.msra.mxu0 %v159
    %985 = vmatprep.subr.mxu0 0.0
    %986 = vmatpush1.msra.mxu0 %v160
    %987 = vmatprep.subr.mxu0 0.0
    %988 = vmatpush1.msra.mxu0 %v161
    %989 = vmatprep.subr.mxu0 0.0
    %990 = vmatpush1.msra.mxu0 %v162
    %991 = vmatprep.subr.mxu0 0.0
    %992 = vmatpush1.msra.mxu0 %v163
    %993 = vmatprep.subr.mxu0 0.0
    %994 = vmatpush1.msra.mxu0 %v164
    %995 = vmatprep.subr.mxu0 0.0
    %996 = vmatpush1.msra.mxu0 %v165
    %997 = vmatprep.subr.mxu0 0.0
    %998 = vmatpush1.msra.mxu0 %v166
    %999 = vmatprep.subr.mxu0 0.0
    %1000 = vmatpush1.msra.mxu0 %v167
    %1001 = vmatprep.subr.mxu0 0.0
    %1002 = vmatpush1.msra.mxu0 %v168
    %1003 = vmatprep.subr.mxu0 0.0
    %1004 = vmatpush1.msra.mxu0 %v169
    %1005 = vmatprep.subr.mxu0 0.0
    %1006 = vmatpush1.msra.mxu0 %v170
    %1007 = vmatprep.subr.mxu0 0.0
    %1008 = vmatpush1.msra.mxu0 %v171
    %1009 = vmatprep.subr.mxu0 0.0
    %1010 = vmatpush1.msra.mxu0 %v172
    %1011 = vmatprep.subr.mxu0 0.0
    %1012 = vmatpush1.msra.mxu0 %v173
    %1013 = vmatprep.subr.mxu0 0.0
    %1014 = vmatpush1.msra.mxu0 %v174
    %1015 = vmatprep.subr.mxu0 0.0
    %1016 = vmatpush1.msra.mxu0 %v175
    %1017 = vmatprep.subr.mxu0 0.0
    %1018 = vmatpush1.msra.mxu0 %v176
    %1019 = vmatprep.subr.mxu0 0.0
    %1020 = vmatpush1.msra.mxu0 %v177
    %1021 = vmatprep.subr.mxu0 0.0
    %1022 = vmatpush1.msra.mxu0 %v178
    %1023 = vmatprep.subr.mxu0 0.0
    %1024 = vmatpush1.msra.mxu0 %v179
    %1025 = vmatprep.subr.mxu0 0.0
    %1026 = vmatpush1.msra.mxu0 %v180
    %1027 = vmatprep.subr.mxu0 0.0
    %1028 = vmatpush1.msra.mxu0 %v181
    %1029 = vmatprep.subr.mxu0 0.0
    %1030 = vmatpush1.msra.mxu0 %v182
    %1031 = vmatprep.subr.mxu0 0.0
    %1032 = vmatpush1.msra.mxu0 %v183
    %1033 = vmatprep.subr.mxu0 0.0
    %1034 = vmatpush1.msra.mxu0 %v184
    %1035 = vmatprep.subr.mxu0 0.0
    %1036 = vmatpush1.msra.mxu0 %v185
    %1037 = vmatprep.subr.mxu0 0.0
    %1038 = vmatpush1.msra.mxu0 %v186
    %1039 = vmatprep.subr.mxu0 0.0
    %1040 = vmatpush1.msra.mxu0 %v187
    %1041 = vmatprep.mubr.f32.mxu0 %v961
    %1042 = vmatmul.mubr.f32.gmra.mrb[0].mxu0 %v953
    %v1043 = vpop.f32.mrb[0].mxu0
    %v1044 = vadd.f32 0.0, %v1043
    %v1045 = vpop.f32.mrb[0].mxu0
    %1046 = vdwg.mxu0
    %1047 = vmatprep.subr.mxu0 0.0
    %1048 = vmatpush1.msra.mxu0 %v188
    %1049 = vmatprep.subr.mxu0 0.0
    %1050 = vmatpush1.msra.mxu0 %v189
    %1051 = vmatprep.subr.mxu0 0.0
    %1052 = vmatpush1.msra.mxu0 %v190
    %1053 = vmatprep.subr.mxu0 0.0
    %1054 = vmatpush1.msra.mxu0 %v191
    %1055 = vmatprep.subr.mxu0 0.0
    %1056 = vmatpush1.msra.mxu0 %v192
    %1057 = vmatprep.subr.mxu0 0.0
    %1058 = vmatpush1.msra.mxu0 %v193
    %1059 = vmatprep.subr.mxu0 0.0
    %1060 = vmatpush1.msra.mxu0 %v194
    %1061 = vmatprep.subr.mxu0 0.0
    %1062 = vmatpush1.msra.mxu0 %v195
    %1063 = vmatprep.subr.mxu0 0.0
    %1064 = vmatpush1.msra.mxu0 %v196
    %1065 = vmatprep.subr.mxu0 0.0
    %1066 = vmatpush1.msra.mxu0 %v197
    %1067 = vmatprep.subr.mxu0 0.0
    %1068 = vmatpush1.msra.mxu0 %v198
    %1069 = vmatprep.subr.mxu0 0.0
    %1070 = vmatpush1.msra.mxu0 %v199
    %1071 = vmatprep.subr.mxu0 0.0
    %1072 = vmatpush1.msra.mxu0 %v200
    %1073 = vmatprep.subr.mxu0 0.0
    %1074 = vmatpush1.msra.mxu0 %v201
    %1075 = vmatprep.subr.mxu0 0.0
    %1076 = vmatpush1.msra.mxu0 %v202
    %1077 = vmatprep.subr.mxu0 0.0
    %1078 = vmatpush1.msra.mxu0 %v203
    %1079 = vmatprep.subr.mxu0 0.0
    %1080 = vmatpush1.msra.mxu0 %v204
    %1081 = vmatprep.subr.mxu0 0.0
    %1082 = vmatpush1.msra.mxu0 %v205
    %1083 = vmatprep.subr.mxu0 0.0
    %1084 = vmatpush1.msra.mxu0 %v206
    %1085 = vmatprep.subr.mxu0 0.0
    %1086 = vmatpush1.msra.mxu0 %v207
    %1087 = vmatprep.subr.mxu0 0.0
    %1088 = vmatpush1.msra.mxu0 %v208
    %1089 = vmatprep.subr.mxu0 0.0
    %1090 = vmatpush1.msra.mxu0 %v209
    %1091 = vmatprep.subr.mxu0 0.0
    %1092 = vmatpush1.msra.mxu0 %v210
    %1093 = vmatprep.subr.mxu0 0.0
    %1094 = vmatpush1.msra.mxu0 %v211
    %1095 = vmatprep.subr.mxu0 0.0
    %1096 = vmatpush1.msra.mxu0 %v212
    %1097 = vmatprep.subr.mxu0 0.0
    %1098 = vmatpush1.msra.mxu0 %v213
    %1099 = vmatprep.subr.mxu0 0.0
    %1100 = vmatpush1.msra.mxu0 %v214
    %1101 = vmatprep.subr.mxu0 0.0
    %1102 = vmatpush1.msra.mxu0 %v215
    %1103 = vmatprep.subr.mxu0 0.0
    %1104 = vmatpush1.msra.mxu0 %v216
    %1105 = vmatprep.subr.mxu0 0.0
    %1106 = vmatpush1.msra.mxu0 %v217
    %1107 = vmatprep.subr.mxu0 0.0
    %1108 = vmatpush1.msra.mxu0 %v218
    %1109 = vmatprep.subr.mxu0 0.0
    %1110 = vmatpush1.msra.mxu0 %v219
    %1111 = vmatprep.mubr.f32.mxu0 %v962
    %1112 = vmatmul.mubr.f32.gmra.mrb[0].mxu0 %v960
    %v1113 = vpop.f32.mrb[0].mxu0
    %v1114 = vadd.f32 %v1044, %v1113
    %v1115 = vpop.f32.mrb[0].mxu0
    %1116 = vdwg.mxu0
    %1117 = vmatprep.subr.mxu0 0.0
    %1118 = vmatpush1.msra.mxu0 %v220
    %1119 = vmatprep.subr.mxu0 0.0
    %1120 = vmatpush1.msra.mxu0 %v221
    %1121 = vmatprep.subr.mxu0 0.0
    %1122 = vmatpush1.msra.mxu0 %v222
    %1123 = vmatprep.subr.mxu0 0.0
    %1124 = vmatpush1.msra.mxu0 %v223
    %1125 = vmatprep.subr.mxu0 0.0
    %1126 = vmatpush1.msra.mxu0 %v224
    %1127 = vmatprep.subr.mxu0 0.0
    %1128 = vmatpush1.msra.mxu0 %v225
    %1129 = vmatprep.subr.mxu0 0.0
    %1130 = vmatpush1.msra.mxu0 %v226
    %1131 = vmatprep.subr.mxu0 0.0
    %1132 = vmatpush1.msra.mxu0 %v227
    %1133 = vmatprep.subr.mxu0 0.0
    %1134 = vmatpush1.msra.mxu0 %v228
    %1135 = vmatprep.subr.mxu0 0.0
    %1136 = vmatpush1.msra.mxu0 %v229
    %1137 = vmatprep.subr.mxu0 0.0
    %1138 = vmatpush1.msra.mxu0 %v230
    %1139 = vmatprep.subr.mxu0 0.0
    %1140 = vmatpush1.msra.mxu0 %v231
    %1141 = vmatprep.subr.mxu0 0.0
    %1142 = vmatpush1.msra.mxu0 %v232
    %1143 = vmatprep.subr.mxu0 0.0
    %1144 = vmatpush1.msra.mxu0 %v233
    %1145 = vmatprep.subr.mxu0 0.0
    %1146 = vmatpush1.msra.mxu0 %v234
    %1147 = vmatprep.subr.mxu0 0.0
    %1148 = vmatpush1.msra.mxu0 %v235
    %1149 = vmatprep.subr.mxu0 0.0
    %1150 = vmatpush1.msra.mxu0 %v236
    %1151 = vmatprep.subr.mxu0 0.0
    %1152 = vmatpush1.msra.mxu0 %v237
    %1153 = vmatprep.subr.mxu0 0.0
    %1154 = vmatpush1.msra.mxu0 %v238
    %1155 = vmatprep.subr.mxu0 0.0
    %1156 = vmatpush1.msra.mxu0 %v239
    %1157 = vmatprep.subr.mxu0 0.0
    %1158 = vmatpush1.msra.mxu0 %v240
    %1159 = vmatprep.subr.mxu0 0.0
    %1160 = vmatpush1.msra.mxu0 %v241
    %1161 = vmatprep.subr.mxu0 0.0
    %1162 = vmatpush1.msra.mxu0 %v242
    %1163 = vmatprep.subr.mxu0 0.0
    %1164 = vmatpush1.msra.mxu0 %v243
    %1165 = vmatprep.subr.mxu0 0.0
    %1166 = vmatpush1.msra.mxu0 %v244
    %1167 = vmatprep.subr.mxu0 0.0
    %1168 = vmatpush1.msra.mxu0 %v245
    %1169 = vmatprep.subr.mxu0 0.0
    %1170 = vmatpush1.msra.mxu0 %v246
    %1171 = vmatprep.subr.mxu0 0.0
    %1172 = vmatpush1.msra.mxu0 %v247
    %1173 = vmatprep.subr.mxu0 0.0
    %1174 = vmatpush1.msra.mxu0 %v248
    %1175 = vmatprep.subr.mxu0 0.0
    %1176 = vmatpush1.msra.mxu0 %v249
    %1177 = vmatprep.subr.mxu0 0.0
    %1178 = vmatpush1.msra.mxu0 %v250
    %1179 = vmatprep.subr.mxu0 0.0
    %1180 = vmatpush1.msra.mxu0 %v251
    %1181 = vmatprep.mubr.f32.mxu0 %v970
    %1182 = vmatmul.mubr.f32.gmra.mrb[0].mxu0 %v969
    %v1183 = vpop.f32.mrb[0].mxu0
    %v1184 = vadd.f32 %v1114, %v1183
    %v1185 = vpop.f32.mrb[0].mxu0
    %1186 = vdwg.mxu0
    %v1189 = vcombine.high %v937, %v937
    %v1191 = vunpack.c.l.s4 1983009808
    %v1192 = vunpack.c.0.s8 %v1191
    %v1193 = vlaneseq
    %v1194 = vshrl.u32 %v1193, 7
    %v1195 = vsub.s32 %v1192, %v1194
    %v1196 = vrot.slane %v937, %v1195
    %v1198 = vunpack.c.l.s4 1983009808
    %v1199 = vunpack.c.0.s8 %v1198
    %v1200 = vlaneseq
    %v1201 = vshrl.u32 %v1200, 7
    %v1202 = vsub.s32 %v1199, %v1201
    %v1203 = vrot.slane %v1189, %v1202
    %v1204 = vcombine.high %v1196, %v1196
    %v1205 = vcombine.high %v1203, %v1203
    %v1206 = vcombine.high %v938, %v938
    %v1208 = vunpack.c.l.s4 1983009808
    %v1209 = vunpack.c.0.s8 %v1208
    %v1210 = vlaneseq
    %v1211 = vshrl.u32 %v1210, 7
    %v1212 = vsub.s32 %v1209, %v1211
    %v1213 = vrot.slane %v938, %v1212
    %v1215 = vunpack.c.l.s4 1983009808
    %v1216 = vunpack.c.0.s8 %v1215
    %v1217 = vlaneseq
    %v1218 = vshrl.u32 %v1217, 7
    %v1219 = vsub.s32 %v1216, %v1218
    %v1220 = vrot.slane %v1206, %v1219
    %v1221 = vcombine.high %v1213, %v1213
    %v1222 = vcombine.high %v1220, %v1220
    %1231 = vmatprep.subr.mxu0 0.0
    %1232 = vmatpush1.msra.mxu0 %v28
    %1233 = vmatprep.subr.mxu0 0.0
    %1234 = vmatpush1.msra.mxu0 %v29
    %1235 = vmatprep.subr.mxu0 0.0
    %1236 = vmatpush1.msra.mxu0 %v30
    %1237 = vmatprep.subr.mxu0 0.0
    %1238 = vmatpush1.msra.mxu0 %v31
    %1239 = vmatprep.subr.mxu0 0.0
    %1240 = vmatpush1.msra.mxu0 %v32
    %1241 = vmatprep.subr.mxu0 0.0
    %1242 = vmatpush1.msra.mxu0 %v33
    %1243 = vmatprep.subr.mxu0 0.0
    %1244 = vmatpush1.msra.mxu0 %v34
    %1245 = vmatprep.subr.mxu0 0.0
    %1246 = vmatpush1.msra.mxu0 %v35
    %1247 = vmatprep.subr.mxu0 0.0
    %1248 = vmatpush1.msra.mxu0 %v36
    %1249 = vmatprep.subr.mxu0 0.0
    %1250 = vmatpush1.msra.mxu0 %v37
    %1251 = vmatprep.subr.mxu0 0.0
    %1252 = vmatpush1.msra.mxu0 %v38
    %1253 = vmatprep.subr.mxu0 0.0
    %1254 = vmatpush1.msra.mxu0 %v39
    %1255 = vmatprep.subr.mxu0 0.0
    %1256 = vmatpush1.msra.mxu0 %v40
    %1257 = vmatprep.subr.mxu0 0.0
    %1258 = vmatpush1.msra.mxu0 %v41
    %1259 = vmatprep.subr.mxu0 0.0
    %1260 = vmatpush1.msra.mxu0 %v42
    %1261 = vmatprep.subr.mxu0 0.0
    %1262 = vmatpush1.msra.mxu0 %v43
    %1263 = vmatprep.subr.mxu0 0.0
    %1264 = vmatpush1.msra.mxu0 %v44
    %1265 = vmatprep.subr.mxu0 0.0
    %1266 = vmatpush1.msra.mxu0 %v45
    %1267 = vmatprep.subr.mxu0 0.0
    %1268 = vmatpush1.msra.mxu0 %v46
    %1269 = vmatprep.subr.mxu0 0.0
    %1270 = vmatpush1.msra.mxu0 %v47
    %1271 = vmatprep.subr.mxu0 0.0
    %1272 = vmatpush1.msra.mxu0 %v48
    %1273 = vmatprep.subr.mxu0 0.0
    %1274 = vmatpush1.msra.mxu0 %v49
    %1275 = vmatprep.subr.mxu0 0.0
    %1276 = vmatpush1.msra.mxu0 %v50
    %1277 = vmatprep.subr.mxu0 0.0
    %1278 = vmatpush1.msra.mxu0 %v51
    %1279 = vmatprep.subr.mxu0 0.0
    %1280 = vmatpush1.msra.mxu0 %v52
    %1281 = vmatprep.subr.mxu0 0.0
    %1282 = vmatpush1.msra.mxu0 %v53
    %1283 = vmatprep.subr.mxu0 0.0
    %1284 = vmatpush1.msra.mxu0 %v54
    %1285 = vmatprep.subr.mxu0 0.0
    %1286 = vmatpush1.msra.mxu0 %v55
    %1287 = vmatprep.subr.mxu0 0.0
    %1288 = vmatpush1.msra.mxu0 %v56
    %1289 = vmatprep.subr.mxu0 0.0
    %1290 = vmatpush1.msra.mxu0 %v57
    %1291 = vmatprep.subr.mxu0 0.0
    %1292 = vmatpush1.msra.mxu0 %v58
    %1293 = vmatprep.subr.mxu0 0.0
    %1294 = vmatpush1.msra.mxu0 %v59
    %1295 = vmatprep.mubr.f32.mxu0 %v1204
    %1296 = vmatmul.mubr.f32.gmra.mrb[0].mxu0 %v1196
    %v1297 = vpop.f32.mrb[0].mxu0
    %v1298 = vadd.f32 %v1184, %v1297
    %v1299 = vpop.f32.mrb[0].mxu0
    %1300 = vdwg.mxu0
    %1301 = vmatprep.subr.mxu0 0.0
    %1302 = vmatpush1.msra.mxu0 %v60
    %1303 = vmatprep.subr.mxu0 0.0
    %1304 = vmatpush1.msra.mxu0 %v61
    %1305 = vmatprep.subr.mxu0 0.0
    %1306 = vmatpush1.msra.mxu0 %v62
    %1307 = vmatprep.subr.mxu0 0.0
    %1308 = vmatpush1.msra.mxu0 %v63
    %1309 = vmatprep.subr.mxu0 0.0
    %1310 = vmatpush1.msra.mxu0 %v64
    %1311 = vmatprep.subr.mxu0 0.0
    %1312 = vmatpush1.msra.mxu0 %v65
    %1313 = vmatprep.subr.mxu0 0.0
    %1314 = vmatpush1.msra.mxu0 %v66
    %1315 = vmatprep.subr.mxu0 0.0
    %1316 = vmatpush1.msra.mxu0 %v67
    %1317 = vmatprep.subr.mxu0 0.0
    %1318 = vmatpush1.msra.mxu0 %v68
    %1319 = vmatprep.subr.mxu0 0.0
    %1320 = vmatpush1.msra.mxu0 %v69
    %1321 = vmatprep.subr.mxu0 0.0
    %1322 = vmatpush1.msra.mxu0 %v70
    %1323 = vmatprep.subr.mxu0 0.0
    %1324 = vmatpush1.msra.mxu0 %v71
    %1325 = vmatprep.subr.mxu0 0.0
    %1326 = vmatpush1.msra.mxu0 %v72
    %1327 = vmatprep.subr.mxu0 0.0
    %1328 = vmatpush1.msra.mxu0 %v73
    %1329 = vmatprep.subr.mxu0 0.0
    %1330 = vmatpush1.msra.mxu0 %v74
    %1331 = vmatprep.subr.mxu0 0.0
    %1332 = vmatpush1.msra.mxu0 %v75
    %1333 = vmatprep.subr.mxu0 0.0
    %1334 = vmatpush1.msra.mxu0 %v76
    %1335 = vmatprep.subr.mxu0 0.0
    %1336 = vmatpush1.msra.mxu0 %v77
    %1337 = vmatprep.subr.mxu0 0.0
    %1338 = vmatpush1.msra.mxu0 %v78
    %1339 = vmatprep.subr.mxu0 0.0
    %1340 = vmatpush1.msra.mxu0 %v79
    %1341 = vmatprep.subr.mxu0 0.0
    %1342 = vmatpush1.msra.mxu0 %v80
    %1343 = vmatprep.subr.mxu0 0.0
    %1344 = vmatpush1.msra.mxu0 %v81
    %1345 = vmatprep.subr.mxu0 0.0
    %1346 = vmatpush1.msra.mxu0 %v82
    %1347 = vmatprep.subr.mxu0 0.0
    %1348 = vmatpush1.msra.mxu0 %v83
    %1349 = vmatprep.subr.mxu0 0.0
    %1350 = vmatpush1.msra.mxu0 %v84
    %1351 = vmatprep.subr.mxu0 0.0
    %1352 = vmatpush1.msra.mxu0 %v85
    %1353 = vmatprep.subr.mxu0 0.0
    %1354 = vmatpush1.msra.mxu0 %v86
    %1355 = vmatprep.subr.mxu0 0.0
    %1356 = vmatpush1.msra.mxu0 %v87
    %1357 = vmatprep.subr.mxu0 0.0
    %1358 = vmatpush1.msra.mxu0 %v88
    %1359 = vmatprep.subr.mxu0 0.0
    %1360 = vmatpush1.msra.mxu0 %v89
    %1361 = vmatprep.subr.mxu0 0.0
    %1362 = vmatpush1.msra.mxu0 %v90
    %1363 = vmatprep.subr.mxu0 0.0
    %1364 = vmatpush1.msra.mxu0 %v91
    %1365 = vmatprep.mubr.f32.mxu0 %v1205
    %1366 = vmatmul.mubr.f32.gmra.mrb[0].mxu0 %v1203
    %v1367 = vpop.f32.mrb[0].mxu0
    %v1368 = vadd.f32 %v1298, %v1367
    %v1369 = vpop.f32.mrb[0].mxu0
    %1370 = vdwg.mxu0
    %1371 = vmatprep.subr.mxu0 0.0
    %1372 = vmatpush1.msra.mxu0 %v92
    %1373 = vmatprep.subr.mxu0 0.0
    %1374 = vmatpush1.msra.mxu0 %v93
    %1375 = vmatprep.subr.mxu0 0.0
    %1376 = vmatpush1.msra.mxu0 %v94
    %1377 = vmatprep.subr.mxu0 0.0
    %1378 = vmatpush1.msra.mxu0 %v95
    %1379 = vmatprep.subr.mxu0 0.0
    %1380 = vmatpush1.msra.mxu0 %v96
    %1381 = vmatprep.subr.mxu0 0.0
    %1382 = vmatpush1.msra.mxu0 %v97
    %1383 = vmatprep.subr.mxu0 0.0
    %1384 = vmatpush1.msra.mxu0 %v98
    %1385 = vmatprep.subr.mxu0 0.0
    %1386 = vmatpush1.msra.mxu0 %v99
    %1387 = vmatprep.subr.mxu0 0.0
    %1388 = vmatpush1.msra.mxu0 %v100
    %1389 = vmatprep.subr.mxu0 0.0
    %1390 = vmatpush1.msra.mxu0 %v101
    %1391 = vmatprep.subr.mxu0 0.0
    %1392 = vmatpush1.msra.mxu0 %v102
    %1393 = vmatprep.subr.mxu0 0.0
    %1394 = vmatpush1.msra.mxu0 %v103
    %1395 = vmatprep.subr.mxu0 0.0
    %1396 = vmatpush1.msra.mxu0 %v104
    %1397 = vmatprep.subr.mxu0 0.0
    %1398 = vmatpush1.msra.mxu0 %v105
    %1399 = vmatprep.subr.mxu0 0.0
    %1400 = vmatpush1.msra.mxu0 %v106
    %1401 = vmatprep.subr.mxu0 0.0
    %1402 = vmatpush1.msra.mxu0 %v107
    %1403 = vmatprep.subr.mxu0 0.0
    %1404 = vmatpush1.msra.mxu0 %v108
    %1405 = vmatprep.subr.mxu0 0.0
    %1406 = vmatpush1.msra.mxu0 %v109
    %1407 = vmatprep.subr.mxu0 0.0
    %1408 = vmatpush1.msra.mxu0 %v110
    %1409 = vmatprep.subr.mxu0 0.0
    %1410 = vmatpush1.msra.mxu0 %v111
    %1411 = vmatprep.subr.mxu0 0.0
    %1412 = vmatpush1.msra.mxu0 %v112
    %1413 = vmatprep.subr.mxu0 0.0
    %1414 = vmatpush1.msra.mxu0 %v113
    %1415 = vmatprep.subr.mxu0 0.0
    %1416 = vmatpush1.msra.mxu0 %v114
    %1417 = vmatprep.subr.mxu0 0.0
    %1418 = vmatpush1.msra.mxu0 %v115
    %1419 = vmatprep.subr.mxu0 0.0
    %1420 = vmatpush1.msra.mxu0 %v116
    %1421 = vmatprep.subr.mxu0 0.0
    %1422 = vmatpush1.msra.mxu0 %v117
    %1423 = vmatprep.subr.mxu0 0.0
    %1424 = vmatpush1.msra.mxu0 %v118
    %1425 = vmatprep.subr.mxu0 0.0
    %1426 = vmatpush1.msra.mxu0 %v119
    %1427 = vmatprep.subr.mxu0 0.0
    %1428 = vmatpush1.msra.mxu0 %v120
    %1429 = vmatprep.subr.mxu0 0.0
    %1430 = vmatpush1.msra.mxu0 %v121
    %1431 = vmatprep.subr.mxu0 0.0
    %1432 = vmatpush1.msra.mxu0 %v122
    %1433 = vmatprep.subr.mxu0 0.0
    %1434 = vmatpush1.msra.mxu0 %v123
    %1435 = vmatprep.mubr.f32.mxu0 %v1221
    %1436 = vmatmul.mubr.f32.gmra.mrb[0].mxu0 %v1213
    %v1437 = vpop.f32.mrb[0].mxu0
    %v1438 = vadd.f32 %v1368, %v1437
    %v1439 = vpop.f32.mrb[0].mxu0
    %1440 = vdwg.mxu0
    %1441 = vmatprep.subr.mxu0 0.0
    %1442 = vmatpush1.msra.mxu0 %v124
    %1443 = vmatprep.subr.mxu0 0.0
    %1444 = vmatpush1.msra.mxu0 %v125
    %1445 = vmatprep.subr.mxu0 0.0
    %1446 = vmatpush1.msra.mxu0 %v126
    %1447 = vmatprep.subr.mxu0 0.0
    %1448 = vmatpush1.msra.mxu0 %v127
    %1449 = vmatprep.subr.mxu0 0.0
    %1450 = vmatpush1.msra.mxu0 %v128
    %1451 = vmatprep.subr.mxu0 0.0
    %1452 = vmatpush1.msra.mxu0 %v129
    %1453 = vmatprep.subr.mxu0 0.0
    %1454 = vmatpush1.msra.mxu0 %v130
    %1455 = vmatprep.subr.mxu0 0.0
    %1456 = vmatpush1.msra.mxu0 %v131
    %1457 = vmatprep.subr.mxu0 0.0
    %1458 = vmatpush1.msra.mxu0 %v132
    %1459 = vmatprep.subr.mxu0 0.0
    %1460 = vmatpush1.msra.mxu0 %v133
    %1461 = vmatprep.subr.mxu0 0.0
    %1462 = vmatpush1.msra.mxu0 %v134
    %1463 = vmatprep.subr.mxu0 0.0
    %1464 = vmatpush1.msra.mxu0 %v135
    %1465 = vmatprep.subr.mxu0 0.0
    %1466 = vmatpush1.msra.mxu0 %v136
    %1467 = vmatprep.subr.mxu0 0.0
    %1468 = vmatpush1.msra.mxu0 %v137
    %1469 = vmatprep.subr.mxu0 0.0
    %1470 = vmatpush1.msra.mxu0 %v138
    %1471 = vmatprep.subr.mxu0 0.0
    %1472 = vmatpush1.msra.mxu0 %v139
    %1473 = vmatprep.subr.mxu0 0.0
    %1474 = vmatpush1.msra.mxu0 %v140
    %1475 = vmatprep.subr.mxu0 0.0
    %1476 = vmatpush1.msra.mxu0 %v141
    %1477 = vmatprep.subr.mxu0 0.0
    %1478 = vmatpush1.msra.mxu0 %v142
    %1479 = vmatprep.subr.mxu0 0.0
    %1480 = vmatpush1.msra.mxu0 %v143
    %1481 = vmatprep.subr.mxu0 0.0
    %1482 = vmatpush1.msra.mxu0 %v144
    %1483 = vmatprep.subr.mxu0 0.0
    %1484 = vmatpush1.msra.mxu0 %v145
    %1485 = vmatprep.subr.mxu0 0.0
    %1486 = vmatpush1.msra.mxu0 %v146
    %1487 = vmatprep.subr.mxu0 0.0
    %1488 = vmatpush1.msra.mxu0 %v147
    %1489 = vmatprep.subr.mxu0 0.0
    %1490 = vmatpush1.msra.mxu0 %v148
    %1491 = vmatprep.subr.mxu0 0.0
    %1492 = vmatpush1.msra.mxu0 %v149
    %1493 = vmatprep.subr.mxu0 0.0
    %1494 = vmatpush1.msra.mxu0 %v150
    %1495 = vmatprep.subr.mxu0 0.0
    %1496 = vmatpush1.msra.mxu0 %v151
    %1497 = vmatprep.subr.mxu0 0.0
    %1498 = vmatpush1.msra.mxu0 %v152
    %1499 = vmatprep.subr.mxu0 0.0
    %1500 = vmatpush1.msra.mxu0 %v153
    %1501 = vmatprep.subr.mxu0 0.0
    %1502 = vmatpush1.msra.mxu0 %v154
    %1503 = vmatprep.subr.mxu0 0.0
    %1504 = vmatpush1.msra.mxu0 %v155
    %1505 = vmatprep.mubr.f32.mxu0 %v1222
    %1506 = vmatmul.mubr.f32.gmra.mrb[0].mxu0 %v1220
    %v1507 = vpop.f32.mrb[0].mxu0
    %v1508 = vadd.f32 %v1438, %v1507
    %v1509 = vpop.f32.mrb[0].mxu0
    %1510 = vdwg.mxu0
    %v1511 = vadd.f32 %v1508, %v864
    %v1512 = vmul.f32 %v943, %v254
    %v1514 = vcombine.high %v1512, %v1512
    %v1516 = vunpack.c.l.s4 1983009808
    %v1517 = vunpack.c.0.s8 %v1516
    %v1518 = vlaneseq
    %v1519 = vshrl.u32 %v1518, 7
    %v1520 = vsub.s32 %v1517, %v1519
    %v1521 = vrot.slane %v1512, %v1520
    %v1523 = vunpack.c.l.s4 1983009808
    %v1524 = vunpack.c.0.s8 %v1523
    %v1525 = vlaneseq
    %v1526 = vshrl.u32 %v1525, 7
    %v1527 = vsub.s32 %v1524, %v1526
    %v1528 = vrot.slane %v1514, %v1527
    %v1529 = vcombine.high %v1521, %v1521
    %v1530 = vcombine.high %v1528, %v1528
    %v1535 = vsel %vm278, %v1521, 0.0
    %v1536 = vsel %vm278, %v1529, 0.0
    %v1537 = vadd.f32 %v1535, %v1536
    %v1538 = vsel %vm278, %v1528, 0.0
    %v1539 = vadd.f32 %v1537, %v1538
    %v1540 = vsel %vm278, %v1530, 0.0
    %v1541 = vadd.f32 %v1539, %v1540
    %1542 = vadd.xlane.f32.xlu0 %v1541
    %v1543 = vpop.xlane.xlu0 %1542
    %v1544 = vmul.f32 %v943, %v943
    %v1546 = vcombine.high %v1544, %v1544
    %v1548 = vunpack.c.l.s4 1983009808
    %v1549 = vunpack.c.0.s8 %v1548
    %v1550 = vlaneseq
    %v1551 = vshrl.u32 %v1550, 7
    %v1552 = vsub.s32 %v1549, %v1551
    %v1553 = vrot.slane %v1544, %v1552
    %v1555 = vunpack.c.l.s4 1983009808
    %v1556 = vunpack.c.0.s8 %v1555
    %v1557 = vlaneseq
    %v1558 = vshrl.u32 %v1557, 7
    %v1559 = vsub.s32 %v1556, %v1558
    %v1560 = vrot.slane %v1546, %v1559
    %v1561 = vcombine.high %v1553, %v1553
    %v1562 = vcombine.high %v1560, %v1560
    %v1567 = vsel %vm278, %v1553, 0.0
    %v1568 = vsel %vm278, %v1561, 0.0
    %v1569 = vadd.f32 %v1567, %v1568
    %v1570 = vsel %vm278, %v1560, 0.0
    %v1571 = vadd.f32 %v1569, %v1570
    %v1572 = vsel %vm278, %v1562, 0.0
    %v1573 = vadd.f32 %v1571, %v1572
    %1574 = vadd.xlane.f32.xlu0 %v1573
    %v1575 = vpop.xlane.xlu0 %1574
    %v1576 = vrsqrt.pop %v1575
    %v1577 = vmul.f32 %v1543, %v1576
    %v1578 = vmul.f32 %v1577, %v288
    %v1579 = vadd.f32 %v1511, %v1578
    %1581 = vrot.lane.b32.xlu0 %v1579, 1
    %v1582 = vpop.permute.xlu0 %1581
    %vm1584 = vcmask 9224
    %1585 = vst.msk [vmem:[#allocation3] sm:$0x3] %vm1584, %v1582
    %v1586 = vld [vmem:[%s0 + $0x10] sm:$0xff]
    %v1587 = vunpack.c.l.bf16 %v1586
    %v1588 = vunpack.c.h.bf16 %v1586
    %v1589 = vld [vmem:[%s1 + $0xc] sm:$0x3f]
    %v1590 = vunpack.c.l.bf16 %v1589
    %v1591 = vunpack.c.h.bf16 %v1589
    %v1592 = vld [vmem:[%s2 + $0x8] sm:$0xf]
    %v1593 = vunpack.c.l.bf16 %v1592
    %v1596 = vcombine.high %v1590, %v1590
    %v1598 = vunpack.c.l.s4 1983009808
    %v1599 = vunpack.c.0.s8 %v1598
    %v1600 = vlaneseq
    %v1601 = vshrl.u32 %v1600, 7
    %v1602 = vsub.s32 %v1599, %v1601
    %v1603 = vrot.slane %v1590, %v1602
    %v1605 = vunpack.c.l.s4 1983009808
    %v1606 = vunpack.c.0.s8 %v1605
    %v1607 = vlaneseq
    %v1608 = vshrl.u32 %v1607, 7
    %v1609 = vsub.s32 %v1606, %v1608
    %v1610 = vrot.slane %v1596, %v1609
    %v1611 = vcombine.high %v1603, %v1603
    %v1612 = vcombine.high %v1610, %v1610
    %v1614 = vunpack.c.l.s4 1983009808
    %v1615 = vunpack.c.0.s8 %v1614
    %v1616 = vlaneseq
    %v1617 = vshrl.u32 %v1616, 7
    %v1618 = vsub.s32 %v1615, %v1617
    %v1619 = vrot.slane %v1591, %v1618
    %v1620 = vcombine.high %v1619, %v1619
    %1627 = vmatprep.subr.mxu0 0.0
    %1628 = vmatpush1.msra.mxu0 %v156
    %1629 = vmatprep.subr.mxu0 0.0
    %1630 = vmatpush1.msra.mxu0 %v157
    %1631 = vmatprep.subr.mxu0 0.0
    %1632 = vmatpush1.msra.mxu0 %v158
    %1633 = vmatprep.subr.mxu0 0.0
    %1634 = vmatpush1.msra.mxu0 %v159
    %1635 = vmatprep.subr.mxu0 0.0
    %1636 = vmatpush1.msra.mxu0 %v160
    %1637 = vmatprep.subr.mxu0 0.0
    %1638 = vmatpush1.msra.mxu0 %v161
    %1639 = vmatprep.subr.mxu0 0.0
    %1640 = vmatpush1.msra.mxu0 %v162
    %1641 = vmatprep.subr.mxu0 0.0
    %1642 = vmatpush1.msra.mxu0 %v163
    %1643 = vmatprep.subr.mxu0 0.0
    %1644 = vmatpush1.msra.mxu0 %v164
    %1645 = vmatprep.subr.mxu0 0.0
    %1646 = vmatpush1.msra.mxu0 %v165
    %1647 = vmatprep.subr.mxu0 0.0
    %1648 = vmatpush1.msra.mxu0 %v166
    %1649 = vmatprep.subr.mxu0 0.0
    %1650 = vmatpush1.msra.mxu0 %v167
    %1651 = vmatprep.subr.mxu0 0.0
    %1652 = vmatpush1.msra.mxu0 %v168
    %1653 = vmatprep.subr.mxu0 0.0
    %1654 = vmatpush1.msra.mxu0 %v169
    %1655 = vmatprep.subr.mxu0 0.0
    %1656 = vmatpush1.msra.mxu0 %v170
    %1657 = vmatprep.subr.mxu0 0.0
    %1658 = vmatpush1.msra.mxu0 %v171
    %1659 = vmatprep.subr.mxu0 0.0
    %1660 = vmatpush1.msra.mxu0 %v172
    %1661 = vmatprep.subr.mxu0 0.0
    %1662 = vmatpush1.msra.mxu0 %v173
    %1663 = vmatprep.subr.mxu0 0.0
    %1664 = vmatpush1.msra.mxu0 %v174
    %1665 = vmatprep.subr.mxu0 0.0
    %1666 = vmatpush1.msra.mxu0 %v175
    %1667 = vmatprep.subr.mxu0 0.0
    %1668 = vmatpush1.msra.mxu0 %v176
    %1669 = vmatprep.subr.mxu0 0.0
    %1670 = vmatpush1.msra.mxu0 %v177
    %1671 = vmatprep.subr.mxu0 0.0
    %1672 = vmatpush1.msra.mxu0 %v178
    %1673 = vmatprep.subr.mxu0 0.0
    %1674 = vmatpush1.msra.mxu0 %v179
    %1675 = vmatprep.subr.mxu0 0.0
    %1676 = vmatpush1.msra.mxu0 %v180
    %1677 = vmatprep.subr.mxu0 0.0
    %1678 = vmatpush1.msra.mxu0 %v181
    %1679 = vmatprep.subr.mxu0 0.0
    %1680 = vmatpush1.msra.mxu0 %v182
    %1681 = vmatprep.subr.mxu0 0.0
    %1682 = vmatpush1.msra.mxu0 %v183
    %1683 = vmatprep.subr.mxu0 0.0
    %1684 = vmatpush1.msra.mxu0 %v184
    %1685 = vmatprep.subr.mxu0 0.0
    %1686 = vmatpush1.msra.mxu0 %v185
    %1687 = vmatprep.subr.mxu0 0.0
    %1688 = vmatpush1.msra.mxu0 %v186
    %1689 = vmatprep.subr.mxu0 0.0
    %1690 = vmatpush1.msra.mxu0 %v187
    %1691 = vmatprep.mubr.f32.mxu0 %v1611
    %1692 = vmatmul.mubr.f32.gmra.mrb[0].mxu0 %v1603
    %v1693 = vpop.f32.mrb[0].mxu0
    %v1694 = vadd.f32 0.0, %v1693
    %v1695 = vpop.f32.mrb[0].mxu0
    %1696 = vdwg.mxu0
    %1697 = vmatprep.subr.mxu0 0.0
    %1698 = vmatpush1.msra.mxu0 %v188
    %1699 = vmatprep.subr.mxu0 0.0
    %1700 = vmatpush1.msra.mxu0 %v189
    %1701 = vmatprep.subr.mxu0 0.0
    %1702 = vmatpush1.msra.mxu0 %v190
    %1703 = vmatprep.subr.mxu0 0.0
    %1704 = vmatpush1.msra.mxu0 %v191
    %1705 = vmatprep.subr.mxu0 0.0
    %1706 = vmatpush1.msra.mxu0 %v192
    %1707 = vmatprep.subr.mxu0 0.0
    %1708 = vmatpush1.msra.mxu0 %v193
    %1709 = vmatprep.subr.mxu0 0.0
    %1710 = vmatpush1.msra.mxu0 %v194
    %1711 = vmatprep.subr.mxu0 0.0
    %1712 = vmatpush1.msra.mxu0 %v195
    %1713 = vmatprep.subr.mxu0 0.0
    %1714 = vmatpush1.msra.mxu0 %v196
    %1715 = vmatprep.subr.mxu0 0.0
    %1716 = vmatpush1.msra.mxu0 %v197
    %1717 = vmatprep.subr.mxu0 0.0
    %1718 = vmatpush1.msra.mxu0 %v198
    %1719 = vmatprep.subr.mxu0 0.0
    %1720 = vmatpush1.msra.mxu0 %v199
    %1721 = vmatprep.subr.mxu0 0.0
    %1722 = vmatpush1.msra.mxu0 %v200
    %1723 = vmatprep.subr.mxu0 0.0
    %1724 = vmatpush1.msra.mxu0 %v201
    %1725 = vmatprep.subr.mxu0 0.0
    %1726 = vmatpush1.msra.mxu0 %v202
    %1727 = vmatprep.subr.mxu0 0.0
    %1728 = vmatpush1.msra.mxu0 %v203
    %1729 = vmatprep.subr.mxu0 0.0
    %1730 = vmatpush1.msra.mxu0 %v204
    %1731 = vmatprep.subr.mxu0 0.0
    %1732 = vmatpush1.msra.mxu0 %v205
    %1733 = vmatprep.subr.mxu0 0.0
    %1734 = vmatpush1.msra.mxu0 %v206
    %1735 = vmatprep.subr.mxu0 0.0
    %1736 = vmatpush1.msra.mxu0 %v207
    %1737 = vmatprep.subr.mxu0 0.0
    %1738 = vmatpush1.msra.mxu0 %v208
    %1739 = vmatprep.subr.mxu0 0.0
    %1740 = vmatpush1.msra.mxu0 %v209
    %1741 = vmatprep.subr.mxu0 0.0
    %1742 = vmatpush1.msra.mxu0 %v210
    %1743 = vmatprep.subr.mxu0 0.0
    %1744 = vmatpush1.msra.mxu0 %v211
    %1745 = vmatprep.subr.mxu0 0.0
    %1746 = vmatpush1.msra.mxu0 %v212
    %1747 = vmatprep.subr.mxu0 0.0
    %1748 = vmatpush1.msra.mxu0 %v213
    %1749 = vmatprep.subr.mxu0 0.0
    %1750 = vmatpush1.msra.mxu0 %v214
    %1751 = vmatprep.subr.mxu0 0.0
    %1752 = vmatpush1.msra.mxu0 %v215
    %1753 = vmatprep.subr.mxu0 0.0
    %1754 = vmatpush1.msra.mxu0 %v216
    %1755 = vmatprep.subr.mxu0 0.0
    %1756 = vmatpush1.msra.mxu0 %v217
    %1757 = vmatprep.subr.mxu0 0.0
    %1758 = vmatpush1.msra.mxu0 %v218
    %1759 = vmatprep.subr.mxu0 0.0
    %1760 = vmatpush1.msra.mxu0 %v219
    %1761 = vmatprep.mubr.f32.mxu0 %v1612
    %1762 = vmatmul.mubr.f32.gmra.mrb[0].mxu0 %v1610
    %v1763 = vpop.f32.mrb[0].mxu0
    %v1764 = vadd.f32 %v1694, %v1763
    %v1765 = vpop.f32.mrb[0].mxu0
    %1766 = vdwg.mxu0
    %1767 = vmatprep.subr.mxu0 0.0
    %1768 = vmatpush1.msra.mxu0 %v220
    %1769 = vmatprep.subr.mxu0 0.0
    %1770 = vmatpush1.msra.mxu0 %v221
    %1771 = vmatprep.subr.mxu0 0.0
    %1772 = vmatpush1.msra.mxu0 %v222
    %1773 = vmatprep.subr.mxu0 0.0
    %1774 = vmatpush1.msra.mxu0 %v223
    %1775 = vmatprep.subr.mxu0 0.0
    %1776 = vmatpush1.msra.mxu0 %v224
    %1777 = vmatprep.subr.mxu0 0.0
    %1778 = vmatpush1.msra.mxu0 %v225
    %1779 = vmatprep.subr.mxu0 0.0
    %1780 = vmatpush1.msra.mxu0 %v226
    %1781 = vmatprep.subr.mxu0 0.0
    %1782 = vmatpush1.msra.mxu0 %v227
    %1783 = vmatprep.subr.mxu0 0.0
    %1784 = vmatpush1.msra.mxu0 %v228
    %1785 = vmatprep.subr.mxu0 0.0
    %1786 = vmatpush1.msra.mxu0 %v229
    %1787 = vmatprep.subr.mxu0 0.0
    %1788 = vmatpush1.msra.mxu0 %v230
    %1789 = vmatprep.subr.mxu0 0.0
    %1790 = vmatpush1.msra.mxu0 %v231
    %1791 = vmatprep.subr.mxu0 0.0
    %1792 = vmatpush1.msra.mxu0 %v232
    %1793 = vmatprep.subr.mxu0 0.0
    %1794 = vmatpush1.msra.mxu0 %v233
    %1795 = vmatprep.subr.mxu0 0.0
    %1796 = vmatpush1.msra.mxu0 %v234
    %1797 = vmatprep.subr.mxu0 0.0
    %1798 = vmatpush1.msra.mxu0 %v235
    %1799 = vmatprep.subr.mxu0 0.0
    %1800 = vmatpush1.msra.mxu0 %v236
    %1801 = vmatprep.subr.mxu0 0.0
    %1802 = vmatpush1.msra.mxu0 %v237
    %1803 = vmatprep.subr.mxu0 0.0
    %1804 = vmatpush1.msra.mxu0 %v238
    %1805 = vmatprep.subr.mxu0 0.0
    %1806 = vmatpush1.msra.mxu0 %v239
    %1807 = vmatprep.subr.mxu0 0.0
    %1808 = vmatpush1.msra.mxu0 %v240
    %1809 = vmatprep.subr.mxu0 0.0
    %1810 = vmatpush1.msra.mxu0 %v241
    %1811 = vmatprep.subr.mxu0 0.0
    %1812 = vmatpush1.msra.mxu0 %v242
    %1813 = vmatprep.subr.mxu0 0.0
    %1814 = vmatpush1.msra.mxu0 %v243
    %1815 = vmatprep.subr.mxu0 0.0
    %1816 = vmatpush1.msra.mxu0 %v244
    %1817 = vmatprep.subr.mxu0 0.0
    %1818 = vmatpush1.msra.mxu0 %v245
    %1819 = vmatprep.subr.mxu0 0.0
    %1820 = vmatpush1.msra.mxu0 %v246
    %1821 = vmatprep.subr.mxu0 0.0
    %1822 = vmatpush1.msra.mxu0 %v247
    %1823 = vmatprep.subr.mxu0 0.0
    %1824 = vmatpush1.msra.mxu0 %v248
    %1825 = vmatprep.subr.mxu0 0.0
    %1826 = vmatpush1.msra.mxu0 %v249
    %1827 = vmatprep.subr.mxu0 0.0
    %1828 = vmatpush1.msra.mxu0 %v250
    %1829 = vmatprep.subr.mxu0 0.0
    %1830 = vmatpush1.msra.mxu0 %v251
    %1831 = vmatprep.mubr.f32.mxu0 %v1620
    %1832 = vmatmul.mubr.f32.gmra.mrb[0].mxu0 %v1619
    %v1833 = vpop.f32.mrb[0].mxu0
    %v1834 = vadd.f32 %v1764, %v1833
    %v1835 = vpop.f32.mrb[0].mxu0
    %1836 = vdwg.mxu0
    %v1839 = vcombine.high %v1587, %v1587
    %v1841 = vunpack.c.l.s4 1983009808
    %v1842 = vunpack.c.0.s8 %v1841
    %v1843 = vlaneseq
    %v1844 = vshrl.u32 %v1843, 7
    %v1845 = vsub.s32 %v1842, %v1844
    %v1846 = vrot.slane %v1587, %v1845
    %v1848 = vunpack.c.l.s4 1983009808
    %v1849 = vunpack.c.0.s8 %v1848
    %v1850 = vlaneseq
    %v1851 = vshrl.u32 %v1850, 7
    %v1852 = vsub.s32 %v1849, %v1851
    %v1853 = vrot.slane %v1839, %v1852
    %v1854 = vcombine.high %v1846, %v1846
    %v1855 = vcombine.high %v1853, %v1853
    %v1856 = vcombine.high %v1588, %v1588
    %v1858 = vunpack.c.l.s4 1983009808
    %v1859 = vunpack.c.0.s8 %v1858
    %v1860 = vlaneseq
    %v1861 = vshrl.u32 %v1860, 7
    %v1862 = vsub.s32 %v1859, %v1861
    %v1863 = vrot.slane %v1588, %v1862
    %v1865 = vunpack.c.l.s4 1983009808
    %v1866 = vunpack.c.0.s8 %v1865
    %v1867 = vlaneseq
    %v1868 = vshrl.u32 %v1867, 7
    %v1869 = vsub.s32 %v1866, %v1868
    %v1870 = vrot.slane %v1856, %v1869
    %v1871 = vcombine.high %v1863, %v1863
    %v1872 = vcombine.high %v1870, %v1870
    %1881 = vmatprep.subr.mxu0 0.0
    %1882 = vmatpush1.msra.mxu0 %v28
    %1883 = vmatprep.subr.mxu0 0.0
    %1884 = vmatpush1.msra.mxu0 %v29
    %1885 = vmatprep.subr.mxu0 0.0
    %1886 = vmatpush1.msra.mxu0 %v30
    %1887 = vmatprep.subr.mxu0 0.0
    %1888 = vmatpush1.msra.mxu0 %v31
    %1889 = vmatprep.subr.mxu0 0.0
    %1890 = vmatpush1.msra.mxu0 %v32
    %1891 = vmatprep.subr.mxu0 0.0
    %1892 = vmatpush1.msra.mxu0 %v33
    %1893 = vmatprep.subr.mxu0 0.0
    %1894 = vmatpush1.msra.mxu0 %v34
    %1895 = vmatprep.subr.mxu0 0.0
    %1896 = vmatpush1.msra.mxu0 %v35
    %1897 = vmatprep.subr.mxu0 0.0
    %1898 = vmatpush1.msra.mxu0 %v36
    %1899 = vmatprep.subr.mxu0 0.0
    %1900 = vmatpush1.msra.mxu0 %v37
    %1901 = vmatprep.subr.mxu0 0.0
    %1902 = vmatpush1.msra.mxu0 %v38
    %1903 = vmatprep.subr.mxu0 0.0
    %1904 = vmatpush1.msra.mxu0 %v39
    %1905 = vmatprep.subr.mxu0 0.0
    %1906 = vmatpush1.msra.mxu0 %v40
    %1907 = vmatprep.subr.mxu0 0.0
    %1908 = vmatpush1.msra.mxu0 %v41
    %1909 = vmatprep.subr.mxu0 0.0
    %1910 = vmatpush1.msra.mxu0 %v42
    %1911 = vmatprep.subr.mxu0 0.0
    %1912 = vmatpush1.msra.mxu0 %v43
    %1913 = vmatprep.subr.mxu0 0.0
    %1914 = vmatpush1.msra.mxu0 %v44
    %1915 = vmatprep.subr.mxu0 0.0
    %1916 = vmatpush1.msra.mxu0 %v45
    %1917 = vmatprep.subr.mxu0 0.0
    %1918 = vmatpush1.msra.mxu0 %v46
    %1919 = vmatprep.subr.mxu0 0.0
    %1920 = vmatpush1.msra.mxu0 %v47
    %1921 = vmatprep.subr.mxu0 0.0
    %1922 = vmatpush1.msra.mxu0 %v48
    %1923 = vmatprep.subr.mxu0 0.0
    %1924 = vmatpush1.msra.mxu0 %v49
    %1925 = vmatprep.subr.mxu0 0.0
    %1926 = vmatpush1.msra.mxu0 %v50
    %1927 = vmatprep.subr.mxu0 0.0
    %1928 = vmatpush1.msra.mxu0 %v51
    %1929 = vmatprep.subr.mxu0 0.0
    %1930 = vmatpush1.msra.mxu0 %v52
    %1931 = vmatprep.subr.mxu0 0.0
    %1932 = vmatpush1.msra.mxu0 %v53
    %1933 = vmatprep.subr.mxu0 0.0
    %1934 = vmatpush1.msra.mxu0 %v54
    %1935 = vmatprep.subr.mxu0 0.0
    %1936 = vmatpush1.msra.mxu0 %v55
    %1937 = vmatprep.subr.mxu0 0.0
    %1938 = vmatpush1.msra.mxu0 %v56
    %1939 = vmatprep.subr.mxu0 0.0
    %1940 = vmatpush1.msra.mxu0 %v57
    %1941 = vmatprep.subr.mxu0 0.0
    %1942 = vmatpush1.msra.mxu0 %v58
    %1943 = vmatprep.subr.mxu0 0.0
    %1944 = vmatpush1.msra.mxu0 %v59
    %1945 = vmatprep.mubr.f32.mxu0 %v1854
    %1946 = vmatmul.mubr.f32.gmra.mrb[0].mxu0 %v1846
    %v1947 = vpop.f32.mrb[0].mxu0
    %v1948 = vadd.f32 %v1834, %v1947
    %v1949 = vpop.f32.mrb[0].mxu0
    %1950 = vdwg.mxu0
    %1951 = vmatprep.subr.mxu0 0.0
    %1952 = vmatpush1.msra.mxu0 %v60
    %1953 = vmatprep.subr.mxu0 0.0
    %1954 = vmatpush1.msra.mxu0 %v61
    %1955 = vmatprep.subr.mxu0 0.0
    %1956 = vmatpush1.msra.mxu0 %v62
    %1957 = vmatprep.subr.mxu0 0.0
    %1958 = vmatpush1.msra.mxu0 %v63
    %1959 = vmatprep.subr.mxu0 0.0
    %1960 = vmatpush1.msra.mxu0 %v64
    %1961 = vmatprep.subr.mxu0 0.0
    %1962 = vmatpush1.msra.mxu0 %v65
    %1963 = vmatprep.subr.mxu0 0.0
    %1964 = vmatpush1.msra.mxu0 %v66
    %1965 = vmatprep.subr.mxu0 0.0
    %1966 = vmatpush1.msra.mxu0 %v67
    %1967 = vmatprep.subr.mxu0 0.0
    %1968 = vmatpush1.msra.mxu0 %v68
    %1969 = vmatprep.subr.mxu0 0.0
    %1970 = vmatpush1.msra.mxu0 %v69
    %1971 = vmatprep.subr.mxu0 0.0
    %1972 = vmatpush1.msra.mxu0 %v70
    %1973 = vmatprep.subr.mxu0 0.0
    %1974 = vmatpush1.msra.mxu0 %v71
    %1975 = vmatprep.subr.mxu0 0.0
    %1976 = vmatpush1.msra.mxu0 %v72
    %1977 = vmatprep.subr.mxu0 0.0
    %1978 = vmatpush1.msra.mxu0 %v73
    %1979 = vmatprep.subr.mxu0 0.0
    %1980 = vmatpush1.msra.mxu0 %v74
    %1981 = vmatprep.subr.mxu0 0.0
    %1982 = vmatpush1.msra.mxu0 %v75
    %1983 = vmatprep.subr.mxu0 0.0
    %1984 = vmatpush1.msra.mxu0 %v76
    %1985 = vmatprep.subr.mxu0 0.0
    %1986 = vmatpush1.msra.mxu0 %v77
    %1987 = vmatprep.subr.mxu0 0.0
    %1988 = vmatpush1.msra.mxu0 %v78
    %1989 = vmatprep.subr.mxu0 0.0
    %1990 = vmatpush1.msra.mxu0 %v79
    %1991 = vmatprep.subr.mxu0 0.0
    %1992 = vmatpush1.msra.mxu0 %v80
    %1993 = vmatprep.subr.mxu0 0.0
    %1994 = vmatpush1.msra.mxu0 %v81
    %1995 = vmatprep.subr.mxu0 0.0
    %1996 = vmatpush1.msra.mxu0 %v82
    %1997 = vmatprep.subr.mxu0 0.0
    %1998 = vmatpush1.msra.mxu0 %v83
    %1999 = vmatprep.subr.mxu0 0.0
    %2000 = vmatpush1.msra.mxu0 %v84
    %2001 = vmatprep.subr.mxu0 0.0
    %2002 = vmatpush1.msra.mxu0 %v85
    %2003 = vmatprep.subr.mxu0 0.0
    %2004 = vmatpush1.msra.mxu0 %v86
    %2005 = vmatprep.subr.mxu0 0.0
    %2006 = vmatpush1.msra.mxu0 %v87
    %2007 = vmatprep.subr.mxu0 0.0
    %2008 = vmatpush1.msra.mxu0 %v88
    %2009 = vmatprep.subr.mxu0 0.0
    %2010 = vmatpush1.msra.mxu0 %v89
    %2011 = vmatprep.subr.mxu0 0.0
    %2012 = vmatpush1.msra.mxu0 %v90
    %2013 = vmatprep.subr.mxu0 0.0
    %2014 = vmatpush1.msra.mxu0 %v91
    %2015 = vmatprep.mubr.f32.mxu0 %v1855
    %2016 = vmatmul.mubr.f32.gmra.mrb[0].mxu0 %v1853
    %v2017 = vpop.f32.mrb[0].mxu0
    %v2018 = vadd.f32 %v1948, %v2017
    %v2019 = vpop.f32.mrb[0].mxu0
    %2020 = vdwg.mxu0
    %2021 = vmatprep.subr.mxu0 0.0
    %2022 = vmatpush1.msra.mxu0 %v92
    %2023 = vmatprep.subr.mxu0 0.0
    %2024 = vmatpush1.msra.mxu0 %v93
    %2025 = vmatprep.subr.mxu0 0.0
    %2026 = vmatpush1.msra.mxu0 %v94
    %2027 = vmatprep.subr.mxu0 0.0
    %2028 = vmatpush1.msra.mxu0 %v95
    %2029 = vmatprep.subr.mxu0 0.0
    %2030 = vmatpush1.msra.mxu0 %v96
    %2031 = vmatprep.subr.mxu0 0.0
    %2032 = vmatpush1.msra.mxu0 %v97
    %2033 = vmatprep.subr.mxu0 0.0
    %2034 = vmatpush1.msra.mxu0 %v98
    %2035 = vmatprep.subr.mxu0 0.0
    %2036 = vmatpush1.msra.mxu0 %v99
    %2037 = vmatprep.subr.mxu0 0.0
    %2038 = vmatpush1.msra.mxu0 %v100
    %2039 = vmatprep.subr.mxu0 0.0
    %2040 = vmatpush1.msra.mxu0 %v101
    %2041 = vmatprep.subr.mxu0 0.0
    %2042 = vmatpush1.msra.mxu0 %v102
    %2043 = vmatprep.subr.mxu0 0.0
    %2044 = vmatpush1.msra.mxu0 %v103
    %2045 = vmatprep.subr.mxu0 0.0
    %2046 = vmatpush1.msra.mxu0 %v104
    %2047 = vmatprep.subr.mxu0 0.0
    %2048 = vmatpush1.msra.mxu0 %v105
    %2049 = vmatprep.subr.mxu0 0.0
    %2050 = vmatpush1.msra.mxu0 %v106
    %2051 = vmatprep.subr.mxu0 0.0
    %2052 = vmatpush1.msra.mxu0 %v107
    %2053 = vmatprep.subr.mxu0 0.0
    %2054 = vmatpush1.msra.mxu0 %v108
    %2055 = vmatprep.subr.mxu0 0.0
    %2056 = vmatpush1.msra.mxu0 %v109
    %2057 = vmatprep.subr.mxu0 0.0
    %2058 = vmatpush1.msra.mxu0 %v110
    %2059 = vmatprep.subr.mxu0 0.0
    %2060 = vmatpush1.msra.mxu0 %v111
    %2061 = vmatprep.subr.mxu0 0.0
    %2062 = vmatpush1.msra.mxu0 %v112
    %2063 = vmatprep.subr.mxu0 0.0
    %2064 = vmatpush1.msra.mxu0 %v113
    %2065 = vmatprep.subr.mxu0 0.0
    %2066 = vmatpush1.msra.mxu0 %v114
    %2067 = vmatprep.subr.mxu0 0.0
    %2068 = vmatpush1.msra.mxu0 %v115
    %2069 = vmatprep.subr.mxu0 0.0
    %2070 = vmatpush1.msra.mxu0 %v116
    %2071 = vmatprep.subr.mxu0 0.0
    %2072 = vmatpush1.msra.mxu0 %v117
    %2073 = vmatprep.subr.mxu0 0.0
    %2074 = vmatpush1.msra.mxu0 %v118
    %2075 = vmatprep.subr.mxu0 0.0
    %2076 = vmatpush1.msra.mxu0 %v119
    %2077 = vmatprep.subr.mxu0 0.0
    %2078 = vmatpush1.msra.mxu0 %v120
    %2079 = vmatprep.subr.mxu0 0.0
    %2080 = vmatpush1.msra.mxu0 %v121
    %2081 = vmatprep.subr.mxu0 0.0
    %2082 = vmatpush1.msra.mxu0 %v122
    %2083 = vmatprep.subr.mxu0 0.0
    %2084 = vmatpush1.msra.mxu0 %v123
    %2085 = vmatprep.mubr.f32.mxu0 %v1871
    %2086 = vmatmul.mubr.f32.gmra.mrb[0].mxu0 %v1863
    %v2087 = vpop.f32.mrb[0].mxu0
    %v2088 = vadd.f32 %v2018, %v2087
    %v2089 = vpop.f32.mrb[0].mxu0
    %2090 = vdwg.mxu0
    %2091 = vmatprep.subr.mxu0 0.0
    %2092 = vmatpush1.msra.mxu0 %v124
    %2093 = vmatprep.subr.mxu0 0.0
    %2094 = vmatpush1.msra.mxu0 %v125
    %2095 = vmatprep.subr.mxu0 0.0
    %2096 = vmatpush1.msra.mxu0 %v126
    %2097 = vmatprep.subr.mxu0 0.0
    %2098 = vmatpush1.msra.mxu0 %v127
    %2099 = vmatprep.subr.mxu0 0.0
    %2100 = vmatpush1.msra.mxu0 %v128
    %2101 = vmatprep.subr.mxu0 0.0
    %2102 = vmatpush1.msra.mxu0 %v129
    %2103 = vmatprep.subr.mxu0 0.0
    %2104 = vmatpush1.msra.mxu0 %v130
    %2105 = vmatprep.subr.mxu0 0.0
    %2106 = vmatpush1.msra.mxu0 %v131
    %2107 = vmatprep.subr.mxu0 0.0
    %2108 = vmatpush1.msra.mxu0 %v132
    %2109 = vmatprep.subr.mxu0 0.0
    %2110 = vmatpush1.msra.mxu0 %v133
    %2111 = vmatprep.subr.mxu0 0.0
    %2112 = vmatpush1.msra.mxu0 %v134
    %2113 = vmatprep.subr.mxu0 0.0
    %2114 = vmatpush1.msra.mxu0 %v135
    %2115 = vmatprep.subr.mxu0 0.0
    %2116 = vmatpush1.msra.mxu0 %v136
    %2117 = vmatprep.subr.mxu0 0.0
    %2118 = vmatpush1.msra.mxu0 %v137
    %2119 = vmatprep.subr.mxu0 0.0
    %2120 = vmatpush1.msra.mxu0 %v138
    %2121 = vmatprep.subr.mxu0 0.0
    %2122 = vmatpush1.msra.mxu0 %v139
    %2123 = vmatprep.subr.mxu0 0.0
    %2124 = vmatpush1.msra.mxu0 %v140
    %2125 = vmatprep.subr.mxu0 0.0
    %2126 = vmatpush1.msra.mxu0 %v141
    %2127 = vmatprep.subr.mxu0 0.0
    %2128 = vmatpush1.msra.mxu0 %v142
    %2129 = vmatprep.subr.mxu0 0.0
    %2130 = vmatpush1.msra.mxu0 %v143
    %2131 = vmatprep.subr.mxu0 0.0
    %2132 = vmatpush1.msra.mxu0 %v144
    %2133 = vmatprep.subr.mxu0 0.0
    %2134 = vmatpush1.msra.mxu0 %v145
    %2135 = vmatprep.subr.mxu0 0.0
    %2136 = vmatpush1.msra.mxu0 %v146
    %2137 = vmatprep.subr.mxu0 0.0
    %2138 = vmatpush1.msra.mxu0 %v147
    %2139 = vmatprep.subr.mxu0 0.0
    %2140 = vmatpush1.msra.mxu0 %v148
    %2141 = vmatprep.subr.mxu0 0.0
    %2142 = vmatpush1.msra.mxu0 %v149
    %2143 = vmatprep.subr.mxu0 0.0
    %2144 = vmatpush1.msra.mxu0 %v150
    %2145 = vmatprep.subr.mxu0 0.0
    %2146 = vmatpush1.msra.mxu0 %v151
    %2147 = vmatprep.subr.mxu0 0.0
    %2148 = vmatpush1.msra.mxu0 %v152
    %2149 = vmatprep.subr.mxu0 0.0
    %2150 = vmatpush1.msra.mxu0 %v153
    %2151 = vmatprep.subr.mxu0 0.0
    %2152 = vmatpush1.msra.mxu0 %v154
    %2153 = vmatprep.subr.mxu0 0.0
    %2154 = vmatpush1.msra.mxu0 %v155
    %2155 = vmatprep.mubr.f32.mxu0 %v1872
    %2156 = vmatmul.mubr.f32.gmra.mrb[0].mxu0 %v1870
    %v2157 = vpop.f32.mrb[0].mxu0
    %v2158 = vadd.f32 %v2088, %v2157
    %v2159 = vpop.f32.mrb[0].mxu0
    %2160 = vdwg.mxu0
    %v2161 = vadd.f32 %v2158, %v864
    %v2162 = vmul.f32 %v1593, %v254
    %v2164 = vcombine.high %v2162, %v2162
    %v2166 = vunpack.c.l.s4 1983009808
    %v2167 = vunpack.c.0.s8 %v2166
    %v2168 = vlaneseq
    %v2169 = vshrl.u32 %v2168, 7
    %v2170 = vsub.s32 %v2167, %v2169
    %v2171 = vrot.slane %v2162, %v2170
    %v2173 = vunpack.c.l.s4 1983009808
    %v2174 = vunpack.c.0.s8 %v2173
    %v2175 = vlaneseq
    %v2176 = vshrl.u32 %v2175, 7
    %v2177 = vsub.s32 %v2174, %v2176
    %v2178 = vrot.slane %v2164, %v2177
    %v2179 = vcombine.high %v2171, %v2171
    %v2180 = vcombine.high %v2178, %v2178
    %v2185 = vsel %vm278, %v2171, 0.0
    %v2186 = vsel %vm278, %v2179, 0.0
    %v2187 = vadd.f32 %v2185, %v2186
    %v2188 = vsel %vm278, %v2178, 0.0
    %v2189 = vadd.f32 %v2187, %v2188
    %v2190 = vsel %vm278, %v2180, 0.0
    %v2191 = vadd.f32 %v2189, %v2190
    %2192 = vadd.xlane.f32.xlu0 %v2191
    %v2193 = vpop.xlane.xlu0 %2192
    %v2194 = vmul.f32 %v1593, %v1593
    %v2196 = vcombine.high %v2194, %v2194
    %v2198 = vunpack.c.l.s4 1983009808
    %v2199 = vunpack.c.0.s8 %v2198
    %v2200 = vlaneseq
    %v2201 = vshrl.u32 %v2200, 7
    %v2202 = vsub.s32 %v2199, %v2201
    %v2203 = vrot.slane %v2194, %v2202
    %v2205 = vunpack.c.l.s4 1983009808
    %v2206 = vunpack.c.0.s8 %v2205
    %v2207 = vlaneseq
    %v2208 = vshrl.u32 %v2207, 7
    %v2209 = vsub.s32 %v2206, %v2208
    %v2210 = vrot.slane %v2196, %v2209
    %v2211 = vcombine.high %v2203, %v2203
    %v2212 = vcombine.high %v2210, %v2210
    %v2217 = vsel %vm278, %v2203, 0.0
    %v2218 = vsel %vm278, %v2211, 0.0
    %v2219 = vadd.f32 %v2217, %v2218
    %v2220 = vsel %vm278, %v2210, 0.0
    %v2221 = vadd.f32 %v2219, %v2220
    %v2222 = vsel %vm278, %v2212, 0.0
    %v2223 = vadd.f32 %v2221, %v2222
    %2224 = vadd.xlane.f32.xlu0 %v2223
    %v2225 = vpop.xlane.xlu0 %2224
    %v2226 = vrsqrt.pop %v2225
    %v2227 = vmul.f32 %v2193, %v2226
    %v2228 = vmul.f32 %v2227, %v288
    %v2229 = vadd.f32 %v2161, %v2228
    %2231 = vrot.lane.b32.xlu0 %v2229, 2
    %v2232 = vpop.permute.xlu0 %2231
    %vm2234 = vcmask 17424
    %2235 = vst.msk [vmem:[#allocation3] sm:$0x3] %vm2234, %v2232
    %v2236 = vld [vmem:[%s0 + $0x18] sm:$0xff]
    %v2237 = vunpack.c.l.bf16 %v2236
    %v2238 = vunpack.c.h.bf16 %v2236
    %v2239 = vld [vmem:[%s1 + $0x12] sm:$0x3f]
    %v2240 = vunpack.c.l.bf16 %v2239
    %v2241 = vunpack.c.h.bf16 %v2239
    %v2242 = vld [vmem:[%s2 + $0xc] sm:$0xf]
    %v2243 = vunpack.c.l.bf16 %v2242
    %v2246 = vcombine.high %v2240, %v2240
    %v2248 = vunpack.c.l.s4 1983009808
    %v2249 = vunpack.c.0.s8 %v2248
    %v2250 = vlaneseq
    %v2251 = vshrl.u32 %v2250, 7
    %v2252 = vsub.s32 %v2249, %v2251
    %v2253 = vrot.slane %v2240, %v2252
    %v2255 = vunpack.c.l.s4 1983009808
    %v2256 = vunpack.c.0.s8 %v2255
    %v2257 = vlaneseq
    %v2258 = vshrl.u32 %v2257, 7
    %v2259 = vsub.s32 %v2256, %v2258
    %v2260 = vrot.slane %v2246, %v2259
    %v2261 = vcombine.high %v2253, %v2253
    %v2262 = vcombine.high %v2260, %v2260
    %v2264 = vunpack.c.l.s4 1983009808
    %v2265 = vunpack.c.0.s8 %v2264
    %v2266 = vlaneseq
    %v2267 = vshrl.u32 %v2266, 7
    %v2268 = vsub.s32 %v2265, %v2267
    %v2269 = vrot.slane %v2241, %v2268
    %v2270 = vcombine.high %v2269, %v2269
    %2277 = vmatprep.subr.mxu0 0.0
    %2278 = vmatpush1.msra.mxu0 %v156
    %2279 = vmatprep.subr.mxu0 0.0
    %2280 = vmatpush1.msra.mxu0 %v157
    %2281 = vmatprep.subr.mxu0 0.0
    %2282 = vmatpush1.msra.mxu0 %v158
    %2283 = vmatprep.subr.mxu0 0.0
    %2284 = vmatpush1.msra.mxu0 %v159
    %2285 = vmatprep.subr.mxu0 0.0
    %2286 = vmatpush1.msra.mxu0 %v160
    %2287 = vmatprep.subr.mxu0 0.0
    %2288 = vmatpush1.msra.mxu0 %v161
    %2289 = vmatprep.subr.mxu0 0.0
    %2290 = vmatpush1.msra.mxu0 %v162
    %2291 = vmatprep.subr.mxu0 0.0
    %2292 = vmatpush1.msra.mxu0 %v163
    %2293 = vmatprep.subr.mxu0 0.0
    %2294 = vmatpush1.msra.mxu0 %v164
    %2295 = vmatprep.subr.mxu0 0.0
    %2296 = vmatpush1.msra.mxu0 %v165
    %2297 = vmatprep.subr.mxu0 0.0
    %2298 = vmatpush1.msra.mxu0 %v166
    %2299 = vmatprep.subr.mxu0 0.0
    %2300 = vmatpush1.msra.mxu0 %v167
    %2301 = vmatprep.subr.mxu0 0.0
    %2302 = vmatpush1.msra.mxu0 %v168
    %2303 = vmatprep.subr.mxu0 0.0
    %2304 = vmatpush1.msra.mxu0 %v169
    %2305 = vmatprep.subr.mxu0 0.0
    %2306 = vmatpush1.msra.mxu0 %v170
    %2307 = vmatprep.subr.mxu0 0.0
    %2308 = vmatpush1.msra.mxu0 %v171
    %2309 = vmatprep.subr.mxu0 0.0
    %2310 = vmatpush1.msra.mxu0 %v172
    %2311 = vmatprep.subr.mxu0 0.0
    %2312 = vmatpush1.msra.mxu0 %v173
    %2313 = vmatprep.subr.mxu0 0.0
    %2314 = vmatpush1.msra.mxu0 %v174
    %2315 = vmatprep.subr.mxu0 0.0
    %2316 = vmatpush1.msra.mxu0 %v175
    %2317 = vmatprep.subr.mxu0 0.0
    %2318 = vmatpush1.msra.mxu0 %v176
    %2319 = vmatprep.subr.mxu0 0.0
    %2320 = vmatpush1.msra.mxu0 %v177
    %2321 = vmatprep.subr.mxu0 0.0
    %2322 = vmatpush1.msra.mxu0 %v178
    %2323 = vmatprep.subr.mxu0 0.0
    %2324 = vmatpush1.msra.mxu0 %v179
    %2325 = vmatprep.subr.mxu0 0.0
    %2326 = vmatpush1.msra.mxu0 %v180
    %2327 = vmatprep.subr.mxu0 0.0
    %2328 = vmatpush1.msra.mxu0 %v181
    %2329 = vmatprep.subr.mxu0 0.0
    %2330 = vmatpush1.msra.mxu0 %v182
    %2331 = vmatprep.subr.mxu0 0.0
    %2332 = vmatpush1.msra.mxu0 %v183
    %2333 = vmatprep.subr.mxu0 0.0
    %2334 = vmatpush1.msra.mxu0 %v184
    %2335 = vmatprep.subr.mxu0 0.0
    %2336 = vmatpush1.msra.mxu0 %v185
    %2337 = vmatprep.subr.mxu0 0.0
    %2338 = vmatpush1.msra.mxu0 %v186
    %2339 = vmatprep.subr.mxu0 0.0
    %2340 = vmatpush1.msra.mxu0 %v187
    %2341 = vmatprep.mubr.f32.mxu0 %v2261
    %2342 = vmatmul.mubr.f32.gmra.mrb[0].mxu0 %v2253
    %v2343 = vpop.f32.mrb[0].mxu0
    %v2344 = vadd.f32 0.0, %v2343
    %v2345 = vpop.f32.mrb[0].mxu0
    %2346 = vdwg.mxu0
    %2347 = vmatprep.subr.mxu0 0.0
    %2348 = vmatpush1.msra.mxu0 %v188
    %2349 = vmatprep.subr.mxu0 0.0
    %2350 = vmatpush1.msra.mxu0 %v189
    %2351 = vmatprep.subr.mxu0 0.0
    %2352 = vmatpush1.msra.mxu0 %v190
    %2353 = vmatprep.subr.mxu0 0.0
    %2354 = vmatpush1.msra.mxu0 %v191
    %2355 = vmatprep.subr.mxu0 0.0
    %2356 = vmatpush1.msra.mxu0 %v192
    %2357 = vmatprep.subr.mxu0 0.0
    %2358 = vmatpush1.msra.mxu0 %v193
    %2359 = vmatprep.subr.mxu0 0.0
    %2360 = vmatpush1.msra.mxu0 %v194
    %2361 = vmatprep.subr.mxu0 0.0
    %2362 = vmatpush1.msra.mxu0 %v195
    %2363 = vmatprep.subr.mxu0 0.0
    %2364 = vmatpush1.msra.mxu0 %v196
    %2365 = vmatprep.subr.mxu0 0.0
    %2366 = vmatpush1.msra.mxu0 %v197
    %2367 = vmatprep.subr.mxu0 0.0
    %2368 = vmatpush1.msra.mxu0 %v198
    %2369 = vmatprep.subr.mxu0 0.0
    %2370 = vmatpush1.msra.mxu0 %v199
    %2371 = vmatprep.subr.mxu0 0.0
    %2372 = vmatpush1.msra.mxu0 %v200
    %2373 = vmatprep.subr.mxu0 0.0
    %2374 = vmatpush1.msra.mxu0 %v201
    %2375 = vmatprep.subr.mxu0 0.0
    %2376 = vmatpush1.msra.mxu0 %v202
    %2377 = vmatprep.subr.mxu0 0.0
    %2378 = vmatpush1.msra.mxu0 %v203
    %2379 = vmatprep.subr.mxu0 0.0
    %2380 = vmatpush1.msra.mxu0 %v204
    %2381 = vmatprep.subr.mxu0 0.0
    %2382 = vmatpush1.msra.mxu0 %v205
    %2383 = vmatprep.subr.mxu0 0.0
    %2384 = vmatpush1.msra.mxu0 %v206
    %2385 = vmatprep.subr.mxu0 0.0
    %2386 = vmatpush1.msra.mxu0 %v207
    %2387 = vmatprep.subr.mxu0 0.0
    %2388 = vmatpush1.msra.mxu0 %v208
    %2389 = vmatprep.subr.mxu0 0.0
    %2390 = vmatpush1.msra.mxu0 %v209
    %2391 = vmatprep.subr.mxu0 0.0
    %2392 = vmatpush1.msra.mxu0 %v210
    %2393 = vmatprep.subr.mxu0 0.0
    %2394 = vmatpush1.msra.mxu0 %v211
    %2395 = vmatprep.subr.mxu0 0.0
    %2396 = vmatpush1.msra.mxu0 %v212
    %2397 = vmatprep.subr.mxu0 0.0
    %2398 = vmatpush1.msra.mxu0 %v213
    %2399 = vmatprep.subr.mxu0 0.0
    %2400 = vmatpush1.msra.mxu0 %v214
    %2401 = vmatprep.subr.mxu0 0.0
    %2402 = vmatpush1.msra.mxu0 %v215
    %2403 = vmatprep.subr.mxu0 0.0
    %2404 = vmatpush1.msra.mxu0 %v216
    %2405 = vmatprep.subr.mxu0 0.0
    %2406 = vmatpush1.msra.mxu0 %v217
    %2407 = vmatprep.subr.mxu0 0.0
    %2408 = vmatpush1.msra.mxu0 %v218
    %2409 = vmatprep.subr.mxu0 0.0
    %2410 = vmatpush1.msra.mxu0 %v219
    %2411 = vmatprep.mubr.f32.mxu0 %v2262
    %2412 = vmatmul.mubr.f32.gmra.mrb[0].mxu0 %v2260
    %v2413 = vpop.f32.mrb[0].mxu0
    %v2414 = vadd.f32 %v2344, %v2413
    %v2415 = vpop.f32.mrb[0].mxu0
    %2416 = vdwg.mxu0
    %2417 = vmatprep.subr.mxu0 0.0
    %2418 = vmatpush1.msra.mxu0 %v220
    %2419 = vmatprep.subr.mxu0 0.0
    %2420 = vmatpush1.msra.mxu0 %v221
    %2421 = vmatprep.subr.mxu0 0.0
    %2422 = vmatpush1.msra.mxu0 %v222
    %2423 = vmatprep.subr.mxu0 0.0
    %2424 = vmatpush1.msra.mxu0 %v223
    %2425 = vmatprep.subr.mxu0 0.0
    %2426 = vmatpush1.msra.mxu0 %v224
    %2427 = vmatprep.subr.mxu0 0.0
    %2428 = vmatpush1.msra.mxu0 %v225
    %2429 = vmatprep.subr.mxu0 0.0
    %2430 = vmatpush1.msra.mxu0 %v226
    %2431 = vmatprep.subr.mxu0 0.0
    %2432 = vmatpush1.msra.mxu0 %v227
    %2433 = vmatprep.subr.mxu0 0.0
    %2434 = vmatpush1.msra.mxu0 %v228
    %2435 = vmatprep.subr.mxu0 0.0
    %2436 = vmatpush1.msra.mxu0 %v229
    %2437 = vmatprep.subr.mxu0 0.0
    %2438 = vmatpush1.msra.mxu0 %v230
    %2439 = vmatprep.subr.mxu0 0.0
    %2440 = vmatpush1.msra.mxu0 %v231
    %2441 = vmatprep.subr.mxu0 0.0
    %2442 = vmatpush1.msra.mxu0 %v232
    %2443 = vmatprep.subr.mxu0 0.0
    %2444 = vmatpush1.msra.mxu0 %v233
    %2445 = vmatprep.subr.mxu0 0.0
    %2446 = vmatpush1.msra.mxu0 %v234
    %2447 = vmatprep.subr.mxu0 0.0
    %2448 = vmatpush1.msra.mxu0 %v235
    %2449 = vmatprep.subr.mxu0 0.0
    %2450 = vmatpush1.msra.mxu0 %v236
    %2451 = vmatprep.subr.mxu0 0.0
    %2452 = vmatpush1.msra.mxu0 %v237
    %2453 = vmatprep.subr.mxu0 0.0
    %2454 = vmatpush1.msra.mxu0 %v238
    %2455 = vmatprep.subr.mxu0 0.0
    %2456 = vmatpush1.msra.mxu0 %v239
    %2457 = vmatprep.subr.mxu0 0.0
    %2458 = vmatpush1.msra.mxu0 %v240
    %2459 = vmatprep.subr.mxu0 0.0
    %2460 = vmatpush1.msra.mxu0 %v241
    %2461 = vmatprep.subr.mxu0 0.0
    %2462 = vmatpush1.msra.mxu0 %v242
    %2463 = vmatprep.subr.mxu0 0.0
    %2464 = vmatpush1.msra.mxu0 %v243
    %2465 = vmatprep.subr.mxu0 0.0
    %2466 = vmatpush1.msra.mxu0 %v244
    %2467 = vmatprep.subr.mxu0 0.0
    %2468 = vmatpush1.msra.mxu0 %v245
    %2469 = vmatprep.subr.mxu0 0.0
    %2470 = vmatpush1.msra.mxu0 %v246
    %2471 = vmatprep.subr.mxu0 0.0
    %2472 = vmatpush1.msra.mxu0 %v247
    %2473 = vmatprep.subr.mxu0 0.0
    %2474 = vmatpush1.msra.mxu0 %v248
    %2475 = vmatprep.subr.mxu0 0.0
    %2476 = vmatpush1.msra.mxu0 %v249
    %2477 = vmatprep.subr.mxu0 0.0
    %2478 = vmatpush1.msra.mxu0 %v250
    %2479 = vmatprep.subr.mxu0 0.0
    %2480 = vmatpush1.msra.mxu0 %v251
    %2481 = vmatprep.mubr.f32.mxu0 %v2270
    %2482 = vmatmul.mubr.f32.gmra.mrb[0].mxu0 %v2269
    %v2483 = vpop.f32.mrb[0].mxu0
    %v2484 = vadd.f32 %v2414, %v2483
    %v2485 = vpop.f32.mrb[0].mxu0
    %2486 = vdwg.mxu0
    %v2489 = vcombine.high %v2237, %v2237
    %v2491 = vunpack.c.l.s4 1983009808
    %v2492 = vunpack.c.0.s8 %v2491
    %v2493 = vlaneseq
    %v2494 = vshrl.u32 %v2493, 7
    %v2495 = vsub.s32 %v2492, %v2494
    %v2496 = vrot.slane %v2237, %v2495
    %v2498 = vunpack.c.l.s4 1983009808
    %v2499 = vunpack.c.0.s8 %v2498
    %v2500 = vlaneseq
    %v2501 = vshrl.u32 %v2500, 7
    %v2502 = vsub.s32 %v2499, %v2501
    %v2503 = vrot.slane %v2489, %v2502
    %v2504 = vcombine.high %v2496, %v2496
    %v2505 = vcombine.high %v2503, %v2503
    %v2506 = vcombine.high %v2238, %v2238
    %v2508 = vunpack.c.l.s4 1983009808
    %v2509 = vunpack.c.0.s8 %v2508
    %v2510 = vlaneseq
    %v2511 = vshrl.u32 %v2510, 7
    %v2512 = vsub.s32 %v2509, %v2511
    %v2513 = vrot.slane %v2238, %v2512
    %v2515 = vunpack.c.l.s4 1983009808
    %v2516 = vunpack.c.0.s8 %v2515
    %v2517 = vlaneseq
    %v2518 = vshrl.u32 %v2517, 7
    %v2519 = vsub.s32 %v2516, %v2518
    %v2520 = vrot.slane %v2506, %v2519
    %v2521 = vcombine.high %v2513, %v2513
    %v2522 = vcombine.high %v2520, %v2520
    %2531 = vmatprep.subr.mxu0 0.0
    %2532 = vmatpush1.msra.mxu0 %v28
    %2533 = vmatprep.subr.mxu0 0.0
    %2534 = vmatpush1.msra.mxu0 %v29
    %2535 = vmatprep.subr.mxu0 0.0
    %2536 = vmatpush1.msra.mxu0 %v30
    %2537 = vmatprep.subr.mxu0 0.0
    %2538 = vmatpush1.msra.mxu0 %v31
    %2539 = vmatprep.subr.mxu0 0.0
    %2540 = vmatpush1.msra.mxu0 %v32
    %2541 = vmatprep.subr.mxu0 0.0
    %2542 = vmatpush1.msra.mxu0 %v33
    %2543 = vmatprep.subr.mxu0 0.0
    %2544 = vmatpush1.msra.mxu0 %v34
    %2545 = vmatprep.subr.mxu0 0.0
    %2546 = vmatpush1.msra.mxu0 %v35
    %2547 = vmatprep.subr.mxu0 0.0
    %2548 = vmatpush1.msra.mxu0 %v36
    %2549 = vmatprep.subr.mxu0 0.0
    %2550 = vmatpush1.msra.mxu0 %v37
    %2551 = vmatprep.subr.mxu0 0.0
    %2552 = vmatpush1.msra.mxu0 %v38
    %2553 = vmatprep.subr.mxu0 0.0
    %2554 = vmatpush1.msra.mxu0 %v39
    %2555 = vmatprep.subr.mxu0 0.0
    %2556 = vmatpush1.msra.mxu0 %v40
    %2557 = vmatprep.subr.mxu0 0.0
    %2558 = vmatpush1.msra.mxu0 %v41
    %2559 = vmatprep.subr.mxu0 0.0
    %2560 = vmatpush1.msra.mxu0 %v42
    %2561 = vmatprep.subr.mxu0 0.0
    %2562 = vmatpush1.msra.mxu0 %v43
    %2563 = vmatprep.subr.mxu0 0.0
    %2564 = vmatpush1.msra.mxu0 %v44
    %2565 = vmatprep.subr.mxu0 0.0
    %2566 = vmatpush1.msra.mxu0 %v45
    %2567 = vmatprep.subr.mxu0 0.0
    %2568 = vmatpush1.msra.mxu0 %v46
    %2569 = vmatprep.subr.mxu0 0.0
    %2570 = vmatpush1.msra.mxu0 %v47
    %2571 = vmatprep.subr.mxu0 0.0
    %2572 = vmatpush1.msra.mxu0 %v48
    %2573 = vmatprep.subr.mxu0 0.0
    %2574 = vmatpush1.msra.mxu0 %v49
    %2575 = vmatprep.subr.mxu0 0.0
    %2576 = vmatpush1.msra.mxu0 %v50
    %2577 = vmatprep.subr.mxu0 0.0
    %2578 = vmatpush1.msra.mxu0 %v51
    %2579 = vmatprep.subr.mxu0 0.0
    %2580 = vmatpush1.msra.mxu0 %v52
    %2581 = vmatprep.subr.mxu0 0.0
    %2582 = vmatpush1.msra.mxu0 %v53
    %2583 = vmatprep.subr.mxu0 0.0
    %2584 = vmatpush1.msra.mxu0 %v54
    %2585 = vmatprep.subr.mxu0 0.0
    %2586 = vmatpush1.msra.mxu0 %v55
    %2587 = vmatprep.subr.mxu0 0.0
    %2588 = vmatpush1.msra.mxu0 %v56
    %2589 = vmatprep.subr.mxu0 0.0
    %2590 = vmatpush1.msra.mxu0 %v57
    %2591 = vmatprep.subr.mxu0 0.0
    %2592 = vmatpush1.msra.mxu0 %v58
    %2593 = vmatprep.subr.mxu0 0.0
    %2594 = vmatpush1.msra.mxu0 %v59
    %2595 = vmatprep.mubr.f32.mxu0 %v2504
    %2596 = vmatmul.mubr.f32.gmra.mrb[0].mxu0 %v2496
    %v2597 = vpop.f32.mrb[0].mxu0
    %v2598 = vadd.f32 %v2484, %v2597
    %v2599 = vpop.f32.mrb[0].mxu0
    %2600 = vdwg.mxu0
    %2601 = vmatprep.subr.mxu0 0.0
    %2602 = vmatpush1.msra.mxu0 %v60
    %2603 = vmatprep.subr.mxu0 0.0
    %2604 = vmatpush1.msra.mxu0 %v61
    %2605 = vmatprep.subr.mxu0 0.0
    %2606 = vmatpush1.msra.mxu0 %v62
    %2607 = vmatprep.subr.mxu0 0.0
    %2608 = vmatpush1.msra.mxu0 %v63
    %2609 = vmatprep.subr.mxu0 0.0
    %2610 = vmatpush1.msra.mxu0 %v64
    %2611 = vmatprep.subr.mxu0 0.0
    %2612 = vmatpush1.msra.mxu0 %v65
    %2613 = vmatprep.subr.mxu0 0.0
    %2614 = vmatpush1.msra.mxu0 %v66
    %2615 = vmatprep.subr.mxu0 0.0
    %2616 = vmatpush1.msra.mxu0 %v67
    %2617 = vmatprep.subr.mxu0 0.0
    %2618 = vmatpush1.msra.mxu0 %v68
    %2619 = vmatprep.subr.mxu0 0.0
    %2620 = vmatpush1.msra.mxu0 %v69
    %2621 = vmatprep.subr.mxu0 0.0
    %2622 = vmatpush1.msra.mxu0 %v70
    %2623 = vmatprep.subr.mxu0 0.0
    %2624 = vmatpush1.msra.mxu0 %v71
    %2625 = vmatprep.subr.mxu0 0.0
    %2626 = vmatpush1.msra.mxu0 %v72
    %2627 = vmatprep.subr.mxu0 0.0
    %2628 = vmatpush1.msra.mxu0 %v73
    %2629 = vmatprep.subr.mxu0 0.0
    %2630 = vmatpush1.msra.mxu0 %v74
    %2631 = vmatprep.subr.mxu0 0.0
    %2632 = vmatpush1.msra.mxu0 %v75
    %2633 = vmatprep.subr.mxu0 0.0
    %2634 = vmatpush1.msra.mxu0 %v76
    %2635 = vmatprep.subr.mxu0 0.0
    %2636 = vmatpush1.msra.mxu0 %v77
    %2637 = vmatprep.subr.mxu0 0.0
    %2638 = vmatpush1.msra.mxu0 %v78
    %2639 = vmatprep.subr.mxu0 0.0
    %2640 = vmatpush1.msra.mxu0 %v79
    %2641 = vmatprep.subr.mxu0 0.0
    %2642 = vmatpush1.msra.mxu0 %v80
    %2643 = vmatprep.subr.mxu0 0.0
    %2644 = vmatpush1.msra.mxu0 %v81
    %2645 = vmatprep.subr.mxu0 0.0
    %2646 = vmatpush1.msra.mxu0 %v82
    %2647 = vmatprep.subr.mxu0 0.0
    %2648 = vmatpush1.msra.mxu0 %v83
    %2649 = vmatprep.subr.mxu0 0.0
    %2650 = vmatpush1.msra.mxu0 %v84
    %2651 = vmatprep.subr.mxu0 0.0
    %2652 = vmatpush1.msra.mxu0 %v85
    %2653 = vmatprep.subr.mxu0 0.0
    %2654 = vmatpush1.msra.mxu0 %v86
    %2655 = vmatprep.subr.mxu0 0.0
    %2656 = vmatpush1.msra.mxu0 %v87
    %2657 = vmatprep.subr.mxu0 0.0
    %2658 = vmatpush1.msra.mxu0 %v88
    %2659 = vmatprep.subr.mxu0 0.0
    %2660 = vmatpush1.msra.mxu0 %v89
    %2661 = vmatprep.subr.mxu0 0.0
    %2662 = vmatpush1.msra.mxu0 %v90
    %2663 = vmatprep.subr.mxu0 0.0
    %2664 = vmatpush1.msra.mxu0 %v91
    %2665 = vmatprep.mubr.f32.mxu0 %v2505
    %2666 = vmatmul.mubr.f32.gmra.mrb[0].mxu0 %v2503
    %v2667 = vpop.f32.mrb[0].mxu0
    %v2668 = vadd.f32 %v2598, %v2667
    %v2669 = vpop.f32.mrb[0].mxu0
    %2670 = vdwg.mxu0
    %2671 = vmatprep.subr.mxu0 0.0
    %2672 = vmatpush1.msra.mxu0 %v92
    %2673 = vmatprep.subr.mxu0 0.0
    %2674 = vmatpush1.msra.mxu0 %v93
    %2675 = vmatprep.subr.mxu0 0.0
    %2676 = vmatpush1.msra.mxu0 %v94
    %2677 = vmatprep.subr.mxu0 0.0
    %2678 = vmatpush1.msra.mxu0 %v95
    %2679 = vmatprep.subr.mxu0 0.0
    %2680 = vmatpush1.msra.mxu0 %v96
    %2681 = vmatprep.subr.mxu0 0.0
    %2682 = vmatpush1.msra.mxu0 %v97
    %2683 = vmatprep.subr.mxu0 0.0
    %2684 = vmatpush1.msra.mxu0 %v98
    %2685 = vmatprep.subr.mxu0 0.0
    %2686 = vmatpush1.msra.mxu0 %v99
    %2687 = vmatprep.subr.mxu0 0.0
    %2688 = vmatpush1.msra.mxu0 %v100
    %2689 = vmatprep.subr.mxu0 0.0
    %2690 = vmatpush1.msra.mxu0 %v101
    %2691 = vmatprep.subr.mxu0 0.0
    %2692 = vmatpush1.msra.mxu0 %v102
    %2693 = vmatprep.subr.mxu0 0.0
    %2694 = vmatpush1.msra.mxu0 %v103
    %2695 = vmatprep.subr.mxu0 0.0
    %2696 = vmatpush1.msra.mxu0 %v104
    %2697 = vmatprep.subr.mxu0 0.0
    %2698 = vmatpush1.msra.mxu0 %v105
    %2699 = vmatprep.subr.mxu0 0.0
    %2700 = vmatpush1.msra.mxu0 %v106
    %2701 = vmatprep.subr.mxu0 0.0
    %2702 = vmatpush1.msra.mxu0 %v107
    %2703 = vmatprep.subr.mxu0 0.0
    %2704 = vmatpush1.msra.mxu0 %v108
    %2705 = vmatprep.subr.mxu0 0.0
    %2706 = vmatpush1.msra.mxu0 %v109
    %2707 = vmatprep.subr.mxu0 0.0
    %2708 = vmatpush1.msra.mxu0 %v110
    %2709 = vmatprep.subr.mxu0 0.0
    %2710 = vmatpush1.msra.mxu0 %v111
    %2711 = vmatprep.subr.mxu0 0.0
    %2712 = vmatpush1.msra.mxu0 %v112
    %2713 = vmatprep.subr.mxu0 0.0
    %2714 = vmatpush1.msra.mxu0 %v113
    %2715 = vmatprep.subr.mxu0 0.0
    %2716 = vmatpush1.msra.mxu0 %v114
    %2717 = vmatprep.subr.mxu0 0.0
    %2718 = vmatpush1.msra.mxu0 %v115
    %2719 = vmatprep.subr.mxu0 0.0
    %2720 = vmatpush1.msra.mxu0 %v116
    %2721 = vmatprep.subr.mxu0 0.0
    %2722 = vmatpush1.msra.mxu0 %v117
    %2723 = vmatprep.subr.mxu0 0.0
    %2724 = vmatpush1.msra.mxu0 %v118
    %2725 = vmatprep.subr.mxu0 0.0
    %2726 = vmatpush1.msra.mxu0 %v119
    %2727 = vmatprep.subr.mxu0 0.0
    %2728 = vmatpush1.msra.mxu0 %v120
    %2729 = vmatprep.subr.mxu0 0.0
    %2730 = vmatpush1.msra.mxu0 %v121
    %2731 = vmatprep.subr.mxu0 0.0
    %2732 = vmatpush1.msra.mxu0 %v122
    %2733 = vmatprep.subr.mxu0 0.0
    %2734 = vmatpush1.msra.mxu0 %v123
    %2735 = vmatprep.mubr.f32.mxu0 %v2521
    %2736 = vmatmul.mubr.f32.gmra.mrb[0].mxu0 %v2513
    %v2737 = vpop.f32.mrb[0].mxu0
    %v2738 = vadd.f32 %v2668, %v2737
    %v2739 = vpop.f32.mrb[0].mxu0
    %2740 = vdwg.mxu0
    %2741 = vmatprep.subr.mxu0 0.0
    %2742 = vmatpush1.msra.mxu0 %v124
    %2743 = vmatprep.subr.mxu0 0.0
    %2744 = vmatpush1.msra.mxu0 %v125
    %2745 = vmatprep.subr.mxu0 0.0
    %2746 = vmatpush1.msra.mxu0 %v126
    %2747 = vmatprep.subr.mxu0 0.0
    %2748 = vmatpush1.msra.mxu0 %v127
    %2749 = vmatprep.subr.mxu0 0.0
    %2750 = vmatpush1.msra.mxu0 %v128
    %2751 = vmatprep.subr.mxu0 0.0
    %2752 = vmatpush1.msra.mxu0 %v129
    %2753 = vmatprep.subr.mxu0 0.0
    %2754 = vmatpush1.msra.mxu0 %v130
    %2755 = vmatprep.subr.mxu0 0.0
    %2756 = vmatpush1.msra.mxu0 %v131
    %2757 = vmatprep.subr.mxu0 0.0
    %2758 = vmatpush1.msra.mxu0 %v132
    %2759 = vmatprep.subr.mxu0 0.0
    %2760 = vmatpush1.msra.mxu0 %v133
    %2761 = vmatprep.subr.mxu0 0.0
    %2762 = vmatpush1.msra.mxu0 %v134
    %2763 = vmatprep.subr.mxu0 0.0
    %2764 = vmatpush1.msra.mxu0 %v135
    %2765 = vmatprep.subr.mxu0 0.0
    %2766 = vmatpush1.msra.mxu0 %v136
    %2767 = vmatprep.subr.mxu0 0.0
    %2768 = vmatpush1.msra.mxu0 %v137
    %2769 = vmatprep.subr.mxu0 0.0
    %2770 = vmatpush1.msra.mxu0 %v138
    %2771 = vmatprep.subr.mxu0 0.0
    %2772 = vmatpush1.msra.mxu0 %v139
    %2773 = vmatprep.subr.mxu0 0.0
    %2774 = vmatpush1.msra.mxu0 %v140
    %2775 = vmatprep.subr.mxu0 0.0
    %2776 = vmatpush1.msra.mxu0 %v141
    %2777 = vmatprep.subr.mxu0 0.0
    %2778 = vmatpush1.msra.mxu0 %v142
    %2779 = vmatprep.subr.mxu0 0.0
    %2780 = vmatpush1.msra.mxu0 %v143
    %2781 = vmatprep.subr.mxu0 0.0
    %2782 = vmatpush1.msra.mxu0 %v144
    %2783 = vmatprep.subr.mxu0 0.0
    %2784 = vmatpush1.msra.mxu0 %v145
    %2785 = vmatprep.subr.mxu0 0.0
    %2786 = vmatpush1.msra.mxu0 %v146
    %2787 = vmatprep.subr.mxu0 0.0
    %2788 = vmatpush1.msra.mxu0 %v147
    %2789 = vmatprep.subr.mxu0 0.0
    %2790 = vmatpush1.msra.mxu0 %v148
    %2791 = vmatprep.subr.mxu0 0.0
    %2792 = vmatpush1.msra.mxu0 %v149
    %2793 = vmatprep.subr.mxu0 0.0
    %2794 = vmatpush1.msra.mxu0 %v150
    %2795 = vmatprep.subr.mxu0 0.0
    %2796 = vmatpush1.msra.mxu0 %v151
    %2797 = vmatprep.subr.mxu0 0.0
    %2798 = vmatpush1.msra.mxu0 %v152
    %2799 = vmatprep.subr.mxu0 0.0
    %2800 = vmatpush1.msra.mxu0 %v153
    %2801 = vmatprep.subr.mxu0 0.0
    %2802 = vmatpush1.msra.mxu0 %v154
    %2803 = vmatprep.subr.mxu0 0.0
    %2804 = vmatpush1.msra.mxu0 %v155
    %2805 = vmatprep.mubr.f32.mxu0 %v2522
    %2806 = vmatmul.mubr.f32.gmra.mrb[0].mxu0 %v2520
    %v2807 = vpop.f32.mrb[0].mxu0
    %v2808 = vadd.f32 %v2738, %v2807
    %v2809 = vpop.f32.mrb[0].mxu0
    %2810 = vdwg.mxu0
    %v2811 = vadd.f32 %v2808, %v864
    %v2812 = vmul.f32 %v2243, %v254
    %v2814 = vcombine.high %v2812, %v2812
    %v2816 = vunpack.c.l.s4 1983009808
    %v2817 = vunpack.c.0.s8 %v2816
    %v2818 = vlaneseq
    %v2819 = vshrl.u32 %v2818, 7
    %v2820 = vsub.s32 %v2817, %v2819
    %v2821 = vrot.slane %v2812, %v2820
    %v2823 = vunpack.c.l.s4 1983009808
    %v2824 = vunpack.c.0.s8 %v2823
    %v2825 = vlaneseq
    %v2826 = vshrl.u32 %v2825, 7
    %v2827 = vsub.s32 %v2824, %v2826
    %v2828 = vrot.slane %v2814, %v2827
    %v2829 = vcombine.high %v2821, %v2821
    %v2830 = vcombine.high %v2828, %v2828
    %v2835 = vsel %vm278, %v2821, 0.0
    %v2836 = vsel %vm278, %v2829, 0.0
    %v2837 = vadd.f32 %v2835, %v2836
    %v2838 = vsel %vm278, %v2828, 0.0
    %v2839 = vadd.f32 %v2837, %v2838
    %v2840 = vsel %vm278, %v2830, 0.0
    %v2841 = vadd.f32 %v2839, %v2840
    %2842 = vadd.xlane.f32.xlu0 %v2841
    %v2843 = vpop.xlane.xlu0 %2842
    %v2844 = vmul.f32 %v2243, %v2243
    %v2846 = vcombine.high %v2844, %v2844
    %v2848 = vunpack.c.l.s4 1983009808
    %v2849 = vunpack.c.0.s8 %v2848
    %v2850 = vlaneseq
    %v2851 = vshrl.u32 %v2850, 7
    %v2852 = vsub.s32 %v2849, %v2851
    %v2853 = vrot.slane %v2844, %v2852
    %v2855 = vunpack.c.l.s4 1983009808
    %v2856 = vunpack.c.0.s8 %v2855
    %v2857 = vlaneseq
    %v2858 = vshrl.u32 %v2857, 7
    %v2859 = vsub.s32 %v2856, %v2858
    %v2860 = vrot.slane %v2846, %v2859
    %v2861 = vcombine.high %v2853, %v2853
    %v2862 = vcombine.high %v2860, %v2860
    %v2867 = vsel %vm278, %v2853, 0.0
    %v2868 = vsel %vm278, %v2861, 0.0
    %v2869 = vadd.f32 %v2867, %v2868
    %v2870 = vsel %vm278, %v2860, 0.0
    %v2871 = vadd.f32 %v2869, %v2870
    %v2872 = vsel %vm278, %v2862, 0.0
    %v2873 = vadd.f32 %v2871, %v2872
    %2874 = vadd.xlane.f32.xlu0 %v2873
    %v2875 = vpop.xlane.xlu0 %2874
    %v2876 = vrsqrt.pop %v2875
    %v2877 = vmul.f32 %v2843, %v2876
    %v2878 = vmul.f32 %v2877, %v288
    %v2879 = vadd.f32 %v2811, %v2878
    %2881 = vrot.lane.b32.xlu0 %v2879, 3
    %v2882 = vpop.permute.xlu0 %2881
    %vm2884 = vcmask 25624
    %2885 = vst.msk [vmem:[#allocation3] sm:$0x3] %vm2884, %v2882
    // Predicated region
    $region30: #{tpu_custom_call.1} parent=1 // pred_check
      _
    $region31: #{tpu_custom_call.1} parent=1 // pred_check_branch
      %2887 = sbr.rel (0) target = $region33
    $region32: #{tpu_custom_call.1} parent=1 // pred_region
      %s2889 = ssub.s32 32, 32
      %2890 = vsyncadd [#allocation4], %s2889
      %s2892 = sshll.u32 [#allocation3], 4
      %s2893 = int_to_ptr.vmem [resolvable:$true] %s2892
      %2895 = dma.vmem_to_hbm [thread:$0]  %s2893, 32, %s7, [#allocation4]
    $region33: #{tpu_custom_call.1} parent=1 // pred_fallthru
      _
    // Predicated region
    $region34: #{tpu_custom_call.1} parent=1 // pred_check
      _
    $region35: #{tpu_custom_call.1} parent=1 // pred_check_branch
      %2897 = sbr.rel (0) target = $region37
    $region36: #{tpu_custom_call.1} parent=1 // pred_region
      %2898 = dma.done [#allocation4], 32
    $region37: #{tpu_custom_call.1} parent=1 // pred_fallthru
      _
    %2899 = vsyncpa [#allocation4], 1

</llo_original>
